<compile_context>
chip_gen: v7x
topology: tpu7x:2x2x1
jax: 0.10.0
libtpu: 0.0.40
codegen_flags: <defaults>
</compile_context>

<pallas_src>
import functools

import jax
import jax.numpy as jnp
from jax.experimental import pallas as pl
from jax.experimental.pallas import tpu as pltpu


# ---------------------------------------------------------------------------
# Pallas kernel: fused 3-layer point MLP + per-batch (per-chunk) global max
# ---------------------------------------------------------------------------
def _pc_mlp_kernel(x_ref, w1_ref, b1_ref, w2_ref, b2_ref, w3_ref, b3_ref,
                   feat_ref, gmax_ref, *, num_points, tile_m, tiles_per_chunk,
                   needs_mask):
    c = pl.program_id(1)          # core-chunk index (parallel)
    t = pl.program_id(2)          # point-tile index within the chunk (arbitrary)

    x = x_ref[0]                  # (TM, 3) f32

    # ---- layer 1 (K=3): VPU broadcast-MAC, keeps the MXU slot free ----------
    h = (x[:, 0:1] * w1_ref[0:1, :]
         + x[:, 1:2] * w1_ref[1:2, :]
         + x[:, 2:3] * w1_ref[2:3, :]
         + b1_ref[...])                                       # (TM, 64) f32
    h = jnp.maximum(h, 0.0)

    # ---- layers 2/3: bf16 operands, f32 MXU accumulation, f32 bias/ReLU -----
    h = jnp.dot(h.astype(jnp.bfloat16), w2_ref[...],
                preferred_element_type=jnp.float32) + b2_ref[...]
    h = jnp.maximum(h, 0.0)
    h = jnp.dot(h.astype(jnp.bfloat16), w3_ref[...],
                preferred_element_type=jnp.float32) + b3_ref[...]
    h = jnp.maximum(h, 0.0)                                   # (TM, 256) f32

    # Per-point features (bf16 by default -> halves the dominant HBM writeback).
    feat_ref[0] = h.astype(feat_ref.dtype)

    # ---- per-chunk running max over points -----------------------------------
    # Padding rows (only present when N % tile granularity != 0) are masked with
    # a 0/1 multiply: all activations are >= 0 after ReLU, so 0 never wins.
    hm = h
    if needs_mask:
        gtile = c * tiles_per_chunk + t
        row = gtile * tile_m + jax.lax.broadcasted_iota(jnp.int32, (tile_m, 1), 0)
        hm = h * (row < num_points).astype(h.dtype)
    tile_max = jnp.max(hm, axis=0, keepdims=True)             # (1, 256) f32

    @pl.when(t == 0)
    def _():
        gmax_ref[...] = jnp.zeros_like(gmax_ref)              # valid: features >= 0

    gmax_ref[0] = jnp.maximum(gmax_ref[0], tile_max)


# ---------------------------------------------------------------------------
# Wrapper (BN folding, weight pre-transpose, tiling, padding, megacore split)
# ---------------------------------------------------------------------------
def fold_bn(w, b, gamma, beta, mean, var, eps=1e-5):
    """Fold an eval-mode BatchNorm into the preceding linear (w: (N,K), b: (N,))."""
    s = gamma / jnp.sqrt(var + eps)
    return w * s[:, None], (b - mean) * s + beta


def _round_up(x, m):
    return (x + m - 1) // m * m


def pointcloud_backbone(params, pts, *, tile_m=1024, feat_dtype=jnp.bfloat16,
                        core_split=None):
    """pts: (B, N, 3) -> (features (B, N, 256) [feat_dtype],
                          global_feature (B, 256) [f32])."""
    B, N, _ = pts.shape

    # Big tiles amortize per-grid-step overhead; never exceed (padded) N.
    tile_m = max(8, min(tile_m, _round_up(N, 8)))
    tile_m = _round_up(tile_m, 8)
    num_tiles = pl.cdiv(N, tile_m)

    # v7x megacore: when a single batch element can't occupy both TensorCores,
    # split the point-tile axis into C parallel chunks (cheap final max in JAX).
    if core_split is None:
        core_split = 2 if (B == 1 and num_tiles >= 2) else 1
    C = core_split
    tiles_per_chunk = pl.cdiv(num_tiles, C)
    n_pad = C * tiles_per_chunk * tile_m
    needs_mask = (n_pad != N)

    x = pts.astype(jnp.float32)
    if n_pad != N:
        x = jnp.pad(x, ((0, 0), (0, n_pad - N), (0, 0)))

    # Fold BN into each Linear; pre-transpose to (K, Nout).  One-time XLA work.
    w1, b1 = fold_bn(params["mlp1_w"], params["mlp1_b"], **params["bn1"])
    w2, b2 = fold_bn(params["mlp2_w"], params["mlp2_b"], **params["bn2"])
    w3, b3 = fold_bn(params["mlp3_w"], params["mlp3_b"], **params["bn3"])
    w1t = w1.T.astype(jnp.float32)                 # (3, 64)   used by VPU MAC
    w2t = w2.T.astype(jnp.bfloat16)                # (64, 128)
    w3t = w3.T.astype(jnp.bfloat16)                # (128, 256)
    b1r = b1.reshape(1, -1).astype(jnp.float32)
    b2r = b2.reshape(1, -1).astype(jnp.float32)
    b3r = b3.reshape(1, -1).astype(jnp.float32)

    kern = functools.partial(_pc_mlp_kernel, num_points=N, tile_m=tile_m,
                             tiles_per_chunk=tiles_per_chunk,
                             needs_mask=needs_mask)

    def const_spec(shape):
        return pl.BlockSpec(shape, lambda b, c, t: (0, 0))

    # VMEM budget: double-buffered x + feat blocks plus resident weights.  Only
    # raise the scoped limit if a very large tile is requested (keeps the kernel
    # portable to v7x's 64 MiB VMEM; default tiles use ~2-5 MB).
    feat_bytes = tile_m * 256 * jnp.dtype(feat_dtype).itemsize
    x_bytes = tile_m * 128 * 4            # (tile_m, 3) pads to 128 lanes in VMEM
    est_vmem = 2 * (feat_bytes + x_bytes) + (1 << 20)
    vmem_limit = int(est_vmem * 3 // 2) if est_vmem > (28 << 20) else None

    feat, gmax = pl.pallas_call(
        kern,
        out_shape=(
            jax.ShapeDtypeStruct((B, n_pad, 256), feat_dtype),
            jax.ShapeDtypeStruct((B * C, 1, 256), jnp.float32),
        ),
        grid=(B, C, tiles_per_chunk),
        in_specs=[
            pl.BlockSpec((1, tile_m, 3),
                         lambda b, c, t: (b, c * tiles_per_chunk + t, 0)),
            const_spec((3, 64)), const_spec((1, 64)),
            const_spec((64, 128)), const_spec((1, 128)),
            const_spec((128, 256)), const_spec((1, 256)),
        ],
        out_specs=(
            pl.BlockSpec((1, tile_m, 256),
                         lambda b, c, t: (b, c * tiles_per_chunk + t, 0)),
            pl.BlockSpec((1, 1, 256), lambda b, c, t: (b * C + c, 0, 0)),
        ),
        compiler_params=pltpu.CompilerParams(
            dimension_semantics=("parallel", "parallel", "arbitrary"),
            vmem_limit_bytes=vmem_limit),
    )(x, w1t, b1r, w2t, b2r, w3t, b3r)

    if n_pad != N:
        feat = feat[:, :N, :]
    global_feat = jnp.max(gmax.reshape(B, C, 256), axis=1)   # combine chunk partials
    return feat, global_feat


# ---------------------------------------------------------------------------
# Parameter init + pure-JAX reference (for a sanity check)
# ---------------------------------------------------------------------------
def init_params(key):
    def dense(k, out_f, in_f):
        kw, kb = jax.random.split(k)
        bound = 1.0 / (in_f ** 0.5)
        return (jax.random.uniform(kw, (out_f, in_f), jnp.float32, -bound, bound),
                jax.random.uniform(kb, (out_f,), jnp.float32, -bound, bound))

    def bn(k, n):
        kg, kb = jax.random.split(k)
        return dict(gamma=1.0 + 0.1 * jax.random.normal(kg, (n,), jnp.float32),
                    beta=0.1 * jax.random.normal(kb, (n,), jnp.float32),
                    mean=jnp.zeros((n,), jnp.float32),
                    var=jnp.ones((n,), jnp.float32))

    keys = jax.random.split(key, 6)
    p = {}
    p["mlp1_w"], p["mlp1_b"] = dense(keys[0], 64, 3)
    p["bn1"] = bn(keys[1], 64)
    p["mlp2_w"], p["mlp2_b"] = dense(keys[2], 128, 64)
    p["bn2"] = bn(keys[3], 128)
    p["mlp3_w"], p["mlp3_b"] = dense(keys[4], 256, 128)
    p["bn3"] = bn(keys[5], 256)
    return p


def reference_forward(params, pts):
    B, N, _ = pts.shape
    w1, b1 = fold_bn(params["mlp1_w"], params["mlp1_b"], **params["bn1"])
    w2, b2 = fold_bn(params["mlp2_w"], params["mlp2_b"], **params["bn2"])
    w3, b3 = fold_bn(params["mlp3_w"], params["mlp3_b"], **params["bn3"])
    h = pts.reshape(-1, 3)
    h = jnp.maximum(h @ w1.T + b1, 0.0)
    h = jnp.maximum(h @ w2.T + b2, 0.0)
    h = jnp.maximum(h @ w3.T + b3, 0.0)
    feat = h.reshape(B, N, -1)
    return feat, jnp.max(feat, axis=1)


if __name__ == "__main__":
    key = jax.random.PRNGKey(0)
    kp, kx1, kx2 = jax.random.split(key, 3)
    params = init_params(kp)

    # ---- case 1: small even shapes, defaults (bf16 features, auto tile) -----
    B, NUM_POINTS = 2, 256
    point_cloud = jax.random.normal(kx1, (B, NUM_POINTS, 3), jnp.float32)

    fwd = jax.jit(pointcloud_backbone)
    feat, global_feat = fwd(params, point_cloud)
    jax.block_until_ready((feat, global_feat))

    assert feat.shape == (B, NUM_POINTS, 256)
    assert global_feat.shape == (B, 256)

    ref_feat, ref_gmax = jax.jit(reference_forward)(params, point_cloud)
    assert jnp.allclose(feat.astype(jnp.float32), ref_feat, atol=5e-2, rtol=5e-2)
    assert jnp.allclose(global_feat, ref_gmax, atol=5e-2, rtol=5e-2)

    # ---- case 2: ragged N + B == 1 (padding mask + 2-way point-axis split) ---
    B2, N2 = 1, 300
    pts2 = jax.random.normal(kx2, (B2, N2, 3), jnp.float32)
    fwd2 = jax.jit(functools.partial(pointcloud_backbone, tile_m=128))
    feat2, gfeat2 = fwd2(params, pts2)
    jax.block_until_ready((feat2, gfeat2))

    ref_feat2, ref_g2 = jax.jit(reference_forward)(params, pts2)
    assert feat2.shape == (B2, N2, 256) and gfeat2.shape == (B2, 256)
    assert jnp.allclose(feat2.astype(jnp.float32), ref_feat2, atol=5e-2, rtol=5e-2)
    assert jnp.allclose(gfeat2, ref_g2, atol=5e-2, rtol=5e-2)

    print("KERNEL_OK")
</pallas_src>

<mosaic_0001>
module attributes {stable_mosaic.version = 11 : i64} {
  func.func @_pc_mlp_kernel(%arg0: i32, %arg1: i32, %arg2: i32, %arg3: memref<1x256x3xf32, #tpu.memory_space<vmem>>, %arg4: memref<3x64xf32, #tpu.memory_space<vmem>>, %arg5: memref<1x64xf32, #tpu.memory_space<vmem>>, %arg6: memref<64x128xbf16, #tpu.memory_space<vmem>>, %arg7: memref<1x128xf32, #tpu.memory_space<vmem>>, %arg8: memref<128x256xbf16, #tpu.memory_space<vmem>>, %arg9: memref<1x256xf32, #tpu.memory_space<vmem>>, %arg10: memref<1x256x256xbf16, #tpu.memory_space<vmem>>, %arg11: memref<1x1x256xf32, #tpu.memory_space<vmem>>) attributes {dimension_semantics = [#tpu.dimension_semantics<parallel>, #tpu.dimension_semantics<parallel>, #tpu.dimension_semantics<arbitrary>], iteration_bounds = array<i64: 2, 1, 1>, scalar_prefetch = 0 : i64, scratch_operands = 0 : i64, tpu.core_type = #tpu.core_type<tc>, window_params = [{transform_indices = @transform_0, window_bounds = array<i64: 1, 256, 3>}, {pipeline_mode = #tpu.pipeline_mode<synchronous>, transform_indices = @transform_1, window_bounds = array<i64: 3, 64>}, {pipeline_mode = #tpu.pipeline_mode<synchronous>, transform_indices = @transform_2, window_bounds = array<i64: 1, 64>}, {pipeline_mode = #tpu.pipeline_mode<synchronous>, transform_indices = @transform_3, window_bounds = array<i64: 64, 128>}, {pipeline_mode = #tpu.pipeline_mode<synchronous>, transform_indices = @transform_4, window_bounds = array<i64: 1, 128>}, {pipeline_mode = #tpu.pipeline_mode<synchronous>, transform_indices = @transform_5, window_bounds = array<i64: 128, 256>}, {pipeline_mode = #tpu.pipeline_mode<synchronous>, transform_indices = @transform_6, window_bounds = array<i64: 1, 256>}, {transform_indices = @transform_7, window_bounds = array<i64: 1, 256, 256>}, {transform_indices = @transform_8, window_bounds = array<i64: 1, 1, 256>}]} {
    %c0 = arith.constant 0 : index
    %c0_0 = arith.constant 0 : index
    %c0_1 = arith.constant 0 : index
    %0 = vector.load %arg3[%c0, %c0_0, %c0_1] : memref<1x256x3xf32, #tpu.memory_space<vmem>>, vector<1x256x3xf32>
    %1 = vector.shape_cast %0 : vector<1x256x3xf32> to vector<256x3xf32>
    %2 = vector.extract_strided_slice %1 {offsets = [0, 0], sizes = [256, 1], strides = [1, 1]} : vector<256x3xf32> to vector<256x1xf32>
    %c0_2 = arith.constant 0 : index
    %c0_3 = arith.constant 0 : index
    %3 = vector.load %arg4[%c0_2, %c0_3] : memref<3x64xf32, #tpu.memory_space<vmem>>, vector<1x64xf32>
    %4 = vector.broadcast %2 : vector<256x1xf32> to vector<256x64xf32>
    %5 = vector.broadcast %3 : vector<1x64xf32> to vector<256x64xf32>
    %6 = arith.mulf %4, %5 : vector<256x64xf32>
    %7 = vector.extract_strided_slice %1 {offsets = [0, 1], sizes = [256, 1], strides = [1, 1]} : vector<256x3xf32> to vector<256x1xf32>
    %c1 = arith.constant 1 : index
    %c0_4 = arith.constant 0 : index
    %8 = vector.load %arg4[%c1, %c0_4] : memref<3x64xf32, #tpu.memory_space<vmem>>, vector<1x64xf32>
    %9 = vector.broadcast %7 : vector<256x1xf32> to vector<256x64xf32>
    %10 = vector.broadcast %8 : vector<1x64xf32> to vector<256x64xf32>
    %11 = arith.mulf %9, %10 : vector<256x64xf32>
    %12 = arith.addf %6, %11 : vector<256x64xf32>
    %13 = vector.extract_strided_slice %1 {offsets = [0, 2], sizes = [256, 1], strides = [1, 1]} : vector<256x3xf32> to vector<256x1xf32>
    %c2 = arith.constant 2 : index
    %c0_5 = arith.constant 0 : index
    %14 = vector.load %arg4[%c2, %c0_5] : memref<3x64xf32, #tpu.memory_space<vmem>>, vector<1x64xf32>
    %15 = vector.broadcast %13 : vector<256x1xf32> to vector<256x64xf32>
    %16 = vector.broadcast %14 : vector<1x64xf32> to vector<256x64xf32>
    %17 = arith.mulf %15, %16 : vector<256x64xf32>
    %18 = arith.addf %12, %17 : vector<256x64xf32>
    %c0_6 = arith.constant 0 : index
    %c0_7 = arith.constant 0 : index
    %19 = vector.load %arg5[%c0_6, %c0_7] : memref<1x64xf32, #tpu.memory_space<vmem>>, vector<1x64xf32>
    %20 = vector.broadcast %19 : vector<1x64xf32> to vector<256x64xf32>
    %21 = arith.addf %18, %20 : vector<256x64xf32>
    %cst = arith.constant 0.000000e+00 : f32
    %22 = vector.broadcast %cst : f32 to vector<256x64xf32>
    %23 = arith.maximumf %21, %22 : vector<256x64xf32>
    %24 = arith.truncf %23 : vector<256x64xf32> to vector<256x64xbf16>
    %c0_8 = arith.constant 0 : index
    %c0_9 = arith.constant 0 : index
    %25 = vector.load %arg6[%c0_8, %c0_9] : memref<64x128xbf16, #tpu.memory_space<vmem>>, vector<64x128xbf16>
    %cst_10 = arith.constant dense<0.000000e+00> : vector<256x128xf32>
    %26 = tpu.matmul %24, %25, %cst_10 {dimension_numbers = #tpu.dot_dimension_numbers<[1], [0], [0], [1], [0, 0, 1, 1], [], []>} : vector<256x64xbf16>, vector<64x128xbf16>, vector<256x128xf32> -> vector<256x128xf32>
    %c0_11 = arith.constant 0 : index
    %c0_12 = arith.constant 0 : index
    %27 = vector.load %arg7[%c0_11, %c0_12] : memref<1x128xf32, #tpu.memory_space<vmem>>, vector<1x128xf32>
    %28 = vector.broadcast %27 : vector<1x128xf32> to vector<256x128xf32>
    %29 = arith.addf %26, %28 : vector<256x128xf32>
    %cst_13 = arith.constant 0.000000e+00 : f32
    %30 = vector.broadcast %cst_13 : f32 to vector<256x128xf32>
    %31 = arith.maximumf %29, %30 : vector<256x128xf32>
    %32 = arith.truncf %31 : vector<256x128xf32> to vector<256x128xbf16>
    %c0_14 = arith.constant 0 : index
    %c0_15 = arith.constant 0 : index
    %33 = vector.load %arg8[%c0_14, %c0_15] : memref<128x256xbf16, #tpu.memory_space<vmem>>, vector<128x256xbf16>
    %cst_16 = arith.constant dense<0.000000e+00> : vector<256x256xf32>
    %34 = tpu.matmul %32, %33, %cst_16 {dimension_numbers = #tpu.dot_dimension_numbers<[1], [0], [0], [1], [0, 0, 1, 1], [], []>} : vector<256x128xbf16>, vector<128x256xbf16>, vector<256x256xf32> -> vector<256x256xf32>
    %c0_17 = arith.constant 0 : index
    %c0_18 = arith.constant 0 : index
    %35 = vector.load %arg9[%c0_17, %c0_18] : memref<1x256xf32, #tpu.memory_space<vmem>>, vector<1x256xf32>
    %36 = vector.broadcast %35 : vector<1x256xf32> to vector<256x256xf32>
    %37 = arith.addf %34, %36 : vector<256x256xf32>
    %cst_19 = arith.constant 0.000000e+00 : f32
    %38 = vector.broadcast %cst_19 : f32 to vector<256x256xf32>
    %39 = arith.maximumf %37, %38 : vector<256x256xf32>
    %40 = arith.truncf %39 : vector<256x256xf32> to vector<256x256xbf16>
    %c0_20 = arith.constant 0 : index
    %c0_21 = arith.constant 0 : index
    %c0_22 = arith.constant 0 : index
    %41 = vector.load %arg10[%c0_20, %c0_21, %c0_22] : memref<1x256x256xbf16, #tpu.memory_space<vmem>>, vector<1x256x256xbf16>
    %42 = vector.shape_cast %41 : vector<1x256x256xbf16> to vector<256x256xbf16>
    %43 = vector.shape_cast %40 : vector<256x256xbf16> to vector<1x256x256xbf16>
    tpu.vector_store %arg10[%c0_20, %c0_21, %c0_22], %43 {strides = array<i32>} : memref<1x256x256xbf16, #tpu.memory_space<vmem>>, vector<1x256x256xbf16>,
    %cst_23 = arith.constant dense<0xFF800000> : vector<256xf32>
    %44 = vector.multi_reduction <maximumf>, %39, %cst_23 [0] : vector<256x256xf32> to vector<256xf32>
    %45 = vector.shape_cast %44 : vector<256xf32> to vector<1x256xf32>
    %c0_i32 = arith.constant 0 : i32
    %46 = arith.cmpi eq, %arg2, %c0_i32 : i32
    %47 = arith.extui %46 : i1 to i32
    %c0_i32_24 = arith.constant 0 : i32
    %48 = arith.cmpi ne, %47, %c0_i32_24 : i32
    scf.if %48 {
      %cst_31 = arith.constant 0.000000e+00 : f32
      %55 = vector.broadcast %cst_31 : f32 to vector<1x1x256xf32>
      %c0_32 = arith.constant 0 : index
      %c0_33 = arith.constant 0 : index
      %c0_34 = arith.constant 0 : index
      %56 = vector.load %arg11[%c0_32, %c0_33, %c0_34] : memref<1x1x256xf32, #tpu.memory_space<vmem>>, vector<1x1x256xf32>
      tpu.vector_store %arg11[%c0_32, %c0_33, %c0_34], %55 {strides = array<i32>} : memref<1x1x256xf32, #tpu.memory_space<vmem>>, vector<1x1x256xf32>,
    } else {
    }
    %c0_25 = arith.constant 0 : index
    %c0_26 = arith.constant 0 : index
    %c0_27 = arith.constant 0 : index
    %49 = vector.load %arg11[%c0_25, %c0_26, %c0_27] : memref<1x1x256xf32, #tpu.memory_space<vmem>>, vector<1x1x256xf32>
    %50 = vector.shape_cast %49 : vector<1x1x256xf32> to vector<1x256xf32>
    %51 = arith.maximumf %50, %45 : vector<1x256xf32>
    %c0_28 = arith.constant 0 : index
    %c0_29 = arith.constant 0 : index
    %c0_30 = arith.constant 0 : index
    %52 = vector.load %arg11[%c0_28, %c0_29, %c0_30] : memref<1x1x256xf32, #tpu.memory_space<vmem>>, vector<1x1x256xf32>
    %53 = vector.shape_cast %52 : vector<1x1x256xf32> to vector<1x256xf32>
    %54 = vector.shape_cast %51 : vector<1x256xf32> to vector<1x1x256xf32>
    tpu.vector_store %arg11[%c0_28, %c0_29, %c0_30], %54 {strides = array<i32>} : memref<1x1x256xf32, #tpu.memory_space<vmem>>, vector<1x1x256xf32>,
    return
  }
  func.func @transform_0(%arg0: i32, %arg1: i32, %arg2: i32) -> (i32, i32, i32) {
    %c1_i32 = arith.constant 1 : i32
    %0 = arith.muli %arg1, %c1_i32 : i32
    %1 = arith.addi %0, %arg2 : i32
    %c0_i32 = arith.constant 0 : i32
    %c0_i32_0 = arith.constant 0 : i32
    return %arg0, %1, %c0_i32 : i32, i32, i32
  }
  func.func @transform_1(%arg0: i32, %arg1: i32, %arg2: i32) -> (i32, i32) {
    %c0_i32 = arith.constant 0 : i32
    %c0_i32_0 = arith.constant 0 : i32
    %c0_i32_1 = arith.constant 0 : i32
    return %c0_i32, %c0_i32_0 : i32, i32
  }
  func.func @transform_2(%arg0: i32, %arg1: i32, %arg2: i32) -> (i32, i32) {
    %c0_i32 = arith.constant 0 : i32
    %c0_i32_0 = arith.constant 0 : i32
    %c0_i32_1 = arith.constant 0 : i32
    return %c0_i32, %c0_i32_0 : i32, i32
  }
  func.func @transform_3(%arg0: i32, %arg1: i32, %arg2: i32) -> (i32, i32) {
    %c0_i32 = arith.constant 0 : i32
    %c0_i32_0 = arith.constant 0 : i32
    %c0_i32_1 = arith.constant 0 : i32
    return %c0_i32, %c0_i32_0 : i32, i32
  }
  func.func @transform_4(%arg0: i32, %arg1: i32, %arg2: i32) -> (i32, i32) {
    %c0_i32 = arith.constant 0 : i32
    %c0_i32_0 = arith.constant 0 : i32
    %c0_i32_1 = arith.constant 0 : i32
    return %c0_i32, %c0_i32_0 : i32, i32
  }
  func.func @transform_5(%arg0: i32, %arg1: i32, %arg2: i32) -> (i32, i32) {
    %c0_i32 = arith.constant 0 : i32
    %c0_i32_0 = arith.constant 0 : i32
    %c0_i32_1 = arith.constant 0 : i32
    return %c0_i32, %c0_i32_0 : i32, i32
  }
  func.func @transform_6(%arg0: i32, %arg1: i32, %arg2: i32) -> (i32, i32) {
    %c0_i32 = arith.constant 0 : i32
    %c0_i32_0 = arith.constant 0 : i32
    %c0_i32_1 = arith.constant 0 : i32
    return %c0_i32, %c0_i32_0 : i32, i32
  }
  func.func @transform_7(%arg0: i32, %arg1: i32, %arg2: i32) -> (i32, i32, i32) {
    %c1_i32 = arith.constant 1 : i32
    %0 = arith.muli %arg1, %c1_i32 : i32
    %1 = arith.addi %0, %arg2 : i32
    %c0_i32 = arith.constant 0 : i32
    %c0_i32_0 = arith.constant 0 : i32
    return %arg0, %1, %c0_i32 : i32, i32, i32
  }
  func.func @transform_8(%arg0: i32, %arg1: i32, %arg2: i32) -> (i32, i32, i32) {
    %c1_i32 = arith.constant 1 : i32
    %0 = arith.muli %arg0, %c1_i32 : i32
    %1 = arith.addi %0, %arg1 : i32
    %c0_i32 = arith.constant 0 : i32
    %c0_i32_0 = arith.constant 0 : i32
    %c0_i32_1 = arith.constant 0 : i32
    return %1, %c0_i32, %c0_i32_0 : i32, i32, i32
  }
}

</mosaic_0001>

<llo_original>
// kernel: pointcloud_backbone.1
$region0: #{pointcloud_backbone.1}
  #allocation0 [shape = 'u32[]', space=smem, size = 0x4, offset = 0x4, fixed_abs, tag = 'smem constant byte address 0x4 - core index']
  #allocation1 [shape = 'u32[144,128]{1,0:T(1,128)}', space=vmem, size = 0x12000, scoped, tag = 'internal scratch']
  %s0 = inlined_call_operand.vmem [shape: f32[2,256,3], index: 0, kind: input, shape index: {}]
  %s1 = inlined_call_operand.vmem [shape: f32[3,64], index: 1, kind: input, shape index: {}]
  %s2 = inlined_call_operand.vmem [shape: f32[1,64], index: 2, kind: input, shape index: {}]
  %s3 = inlined_call_operand.vmem [shape: bf16[64,128], index: 3, kind: input, shape index: {}]
  %s4 = inlined_call_operand.vmem [shape: f32[1,128], index: 4, kind: input, shape index: {}]
  %s5 = inlined_call_operand.vmem [shape: bf16[128,256], index: 5, kind: input, shape index: {}]
  %s6 = inlined_call_operand.vmem [shape: f32[1,256], index: 6, kind: input, shape index: {}]
  %s7 = inlined_call_operand.hbm [shape: bf16[2,256,256], index: 7, kind: output, shape index: {0}]
  %s8 = inlined_call_operand.vmem [shape: f32[2,1,256], index: 8, kind: output, shape index: {1}]
  %9 = xla_tuple %s7, %s8
  %s10 = sld [smem:[#allocation0]]
  $region73: #{pointcloud_backbone.1} parent=0
    _
  %s12 = ssub.s32 1, %s10
  %s13 = scalar_select 0, %s12, %s10
  $region1: #{pointcloud_backbone.1} parent=0
    #allocation2 [shape = 'u8[262144]{0}', space=vmem, size = 0x40000, scoped, tag = 'output window, operand 0']
    #allocation3 [shape = 's32[2]{0}', space=sflag, size = 0x8, scoped, tag = 'scoped memory for pointcloud_backbone.1']
    %14 = vsyncpa [#allocation3], 0
    %s15 = scalar_lea.sflag [#allocation3], 1
    %16 = vsyncpa %s15, 0
    loop: start=0, step=1, limit=4
    $region2: #{pointcloud_backbone.1} parent=1 // loop_pre_header
      _
    $region3: #{pointcloud_backbone.1} parent=1 // loop_header
      %s18 = sphi 0, %s22
      %p19 = scmp.ge.s32.totalorder %s18, 4
      %s25 = sphi 0, %s44
      %s26 = sphi 0, %s40
      %s27 = sphi 0, %s36
      %s28 = sphi 0, %s25
      %s29 = sphi 0, %s26
      %s30 = sphi 0, %s27
      %s31 = sphi 0, %s28
      %s32 = sphi 0, %s29
      %s33 = sphi 0, %s30
      %s51 = sphi 0, %s53
      %s54 = sphi 0, %s51
      %s55 = sphi 0, %s54
      %s71 = sphi 0, %s55
      %s75 = sphi 0, %s75
      %s77 = sphi 0, %s75
      %s78 = sphi 0, %s77
      %s92 = sphi 0, %s78
      %s96 = sphi 0, %s96
      %s98 = sphi 0, %s96
      %s99 = sphi 0, %s98
      %s113 = sphi 0, %s99
      %s117 = sphi 0, %s117
      %s119 = sphi 0, %s117
      %s120 = sphi 0, %s119
      %s134 = sphi 0, %s120
      %s138 = sphi 0, %s138
      %s140 = sphi 0, %s138
      %s141 = sphi 0, %s140
      %s155 = sphi 0, %s141
      %s159 = sphi 0, %s159
      %s161 = sphi 0, %s159
      %s162 = sphi 0, %s161
      %s176 = sphi 0, %s162
      %s180 = sphi 0, %s180
      %s182 = sphi 0, %s180
      %s183 = sphi 0, %s182
      %s197 = sphi 0, %s183
      %s207 = sphi 0, %s209
      %s210 = sphi 0, %s207
      %s211 = sphi 0, %s210
      %s227 = sphi 0, %s211
      %s235 = sphi 0, %s237
      %s238 = sphi 0, %s235
      %s239 = sphi 0, %s238
      %s255 = sphi 0, %s239
    $region4: #{pointcloud_backbone.1} parent=1 // loop_header_branch
      %21 = sbr.rel (%p19) target = $region8
    $region5: #{pointcloud_backbone.1} parent=1 // loop_body
      %s23 = ssub.s32 %s18, 1
      %s24 = ssub.s32 %s18, 2
      %s34 = sadd.s32 1, %s27
      %p35 = scmp.ge.s32.totalorder %s34, 1
      %s36 = scalar_select %p35, 0, %s34
      %s37 = sadd.s32 1, %s26
      %s38 = scalar_select %p35, %s37, %s26
      %p39 = scmp.ge.s32.totalorder %s38, 1
      %s40 = scalar_select %p39, 0, %s38
      %s41 = sadd.s32 1, %s25
      %s42 = scalar_select %p39, %s41, %s25
      %p43 = scmp.ge.s32.totalorder %s42, 2
      %s44 = scalar_select %p43, 0, %s42
      %s45 = sadd.s32 %s26, %s27
      %s46 = sadd.s32 %s40, %s36
      %s47 = ssub.s32 %s25, %s44
      %s48 = ssub.s32 %s45, %s46
      %s49 = sor.u32 %s47, %s48
      %p50 = scmp.eq.s32.totalorder %s49, 0
      %s52 = sadd.s32 %s51, 1
      %s53 = scalar_select %p50, %s51, %s52
      %p56 = pneg %p50
      %p57 = scmp.eq.s32.totalorder %s18, 1
      %p58 = por %p56, %p57
      %p59 = scmp.ne.s32.totalorder %s51, %s54
      %p60 = scmp.eq.s32.totalorder %s18, 0
      %p61 = por %p59, %p60
      %p62 = scmp.ne.s32.totalorder %s51, %s54
      %p63 = scmp.eq.s32.totalorder %s23, 1
      %p64 = por %p62, %p63
      %p65 = scmp.ne.s32.totalorder %s54, %s55
      %p66 = scmp.eq.s32.totalorder %s23, 0
      %p67 = por %p65, %p66
      %p68 = scmp.ne.s32.totalorder %s54, %s55
      %p69 = scmp.eq.s32.totalorder %s24, 1
      %p70 = por %p68, %p69
      %p72 = scmp.ne.s32.totalorder %s55, %s71
      %p73 = scmp.eq.s32.totalorder %s24, 0
      %p74 = por %p72, %p73
      %s76 = sadd.s32 %s75, 1
      %p79 = scmp.eq.s32.totalorder %s18, 1
      %p80 = scmp.ne.s32.totalorder %s75, %s77
      %p81 = scmp.eq.s32.totalorder %s18, 0
      %p82 = por %p80, %p81
      %p83 = scmp.ne.s32.totalorder %s75, %s77
      %p84 = scmp.eq.s32.totalorder %s23, 1
      %p85 = por %p83, %p84
      %p86 = scmp.ne.s32.totalorder %s77, %s78
      %p87 = scmp.eq.s32.totalorder %s23, 0
      %p88 = por %p86, %p87
      %p89 = scmp.ne.s32.totalorder %s77, %s78
      %p90 = scmp.eq.s32.totalorder %s24, 1
      %p91 = por %p89, %p90
      %p93 = scmp.ne.s32.totalorder %s78, %s92
      %p94 = scmp.eq.s32.totalorder %s24, 0
      %p95 = por %p93, %p94
      %s97 = sadd.s32 %s96, 1
      %p100 = scmp.eq.s32.totalorder %s18, 1
      %p101 = scmp.ne.s32.totalorder %s96, %s98
      %p102 = scmp.eq.s32.totalorder %s18, 0
      %p103 = por %p101, %p102
      %p104 = scmp.ne.s32.totalorder %s96, %s98
      %p105 = scmp.eq.s32.totalorder %s23, 1
      %p106 = por %p104, %p105
      %p107 = scmp.ne.s32.totalorder %s98, %s99
      %p108 = scmp.eq.s32.totalorder %s23, 0
      %p109 = por %p107, %p108
      %p110 = scmp.ne.s32.totalorder %s98, %s99
      %p111 = scmp.eq.s32.totalorder %s24, 1
      %p112 = por %p110, %p111
      %p114 = scmp.ne.s32.totalorder %s99, %s113
      %p115 = scmp.eq.s32.totalorder %s24, 0
      %p116 = por %p114, %p115
      %s118 = sadd.s32 %s117, 1
      %p121 = scmp.eq.s32.totalorder %s18, 1
      %p122 = scmp.ne.s32.totalorder %s117, %s119
      %p123 = scmp.eq.s32.totalorder %s18, 0
      %p124 = por %p122, %p123
      %p125 = scmp.ne.s32.totalorder %s117, %s119
      %p126 = scmp.eq.s32.totalorder %s23, 1
      %p127 = por %p125, %p126
      %p128 = scmp.ne.s32.totalorder %s119, %s120
      %p129 = scmp.eq.s32.totalorder %s23, 0
      %p130 = por %p128, %p129
      %p131 = scmp.ne.s32.totalorder %s119, %s120
      %p132 = scmp.eq.s32.totalorder %s24, 1
      %p133 = por %p131, %p132
      %p135 = scmp.ne.s32.totalorder %s120, %s134
      %p136 = scmp.eq.s32.totalorder %s24, 0
      %p137 = por %p135, %p136
      %s139 = sadd.s32 %s138, 1
      %p142 = scmp.eq.s32.totalorder %s18, 1
      %p143 = scmp.ne.s32.totalorder %s138, %s140
      %p144 = scmp.eq.s32.totalorder %s18, 0
      %p145 = por %p143, %p144
      %p146 = scmp.ne.s32.totalorder %s138, %s140
      %p147 = scmp.eq.s32.totalorder %s23, 1
      %p148 = por %p146, %p147
      %p149 = scmp.ne.s32.totalorder %s140, %s141
      %p150 = scmp.eq.s32.totalorder %s23, 0
      %p151 = por %p149, %p150
      %p152 = scmp.ne.s32.totalorder %s140, %s141
      %p153 = scmp.eq.s32.totalorder %s24, 1
      %p154 = por %p152, %p153
      %p156 = scmp.ne.s32.totalorder %s141, %s155
      %p157 = scmp.eq.s32.totalorder %s24, 0
      %p158 = por %p156, %p157
      %s160 = sadd.s32 %s159, 1
      %p163 = scmp.eq.s32.totalorder %s18, 1
      %p164 = scmp.ne.s32.totalorder %s159, %s161
      %p165 = scmp.eq.s32.totalorder %s18, 0
      %p166 = por %p164, %p165
      %p167 = scmp.ne.s32.totalorder %s159, %s161
      %p168 = scmp.eq.s32.totalorder %s23, 1
      %p169 = por %p167, %p168
      %p170 = scmp.ne.s32.totalorder %s161, %s162
      %p171 = scmp.eq.s32.totalorder %s23, 0
      %p172 = por %p170, %p171
      %p173 = scmp.ne.s32.totalorder %s161, %s162
      %p174 = scmp.eq.s32.totalorder %s24, 1
      %p175 = por %p173, %p174
      %p177 = scmp.ne.s32.totalorder %s162, %s176
      %p178 = scmp.eq.s32.totalorder %s24, 0
      %p179 = por %p177, %p178
      %s181 = sadd.s32 %s180, 1
      %p184 = scmp.eq.s32.totalorder %s18, 1
      %p185 = scmp.ne.s32.totalorder %s180, %s182
      %p186 = scmp.eq.s32.totalorder %s18, 0
      %p187 = por %p185, %p186
      %p188 = scmp.ne.s32.totalorder %s180, %s182
      %p189 = scmp.eq.s32.totalorder %s23, 1
      %p190 = por %p188, %p189
      %p191 = scmp.ne.s32.totalorder %s182, %s183
      %p192 = scmp.eq.s32.totalorder %s23, 0
      %p193 = por %p191, %p192
      %p194 = scmp.ne.s32.totalorder %s182, %s183
      %p195 = scmp.eq.s32.totalorder %s24, 1
      %p196 = por %p194, %p195
      %p198 = scmp.ne.s32.totalorder %s183, %s197
      %p199 = scmp.eq.s32.totalorder %s24, 0
      %p200 = por %p198, %p199
      %s201 = sadd.s32 %s26, %s27
      %s202 = sadd.s32 %s40, %s36
      %s203 = ssub.s32 %s25, %s44
      %s204 = ssub.s32 %s201, %s202
      %s205 = sor.u32 %s203, %s204
      %p206 = scmp.eq.s32.totalorder %s205, 0
      %s208 = sadd.s32 %s207, 1
      %s209 = scalar_select %p206, %s207, %s208
      %p212 = pneg %p206
      %p213 = scmp.eq.s32.totalorder %s18, 1
      %p214 = por %p212, %p213
      %p215 = scmp.ne.s32.totalorder %s207, %s210
      %p216 = scmp.eq.s32.totalorder %s18, 0
      %p217 = por %p215, %p216
      %p218 = scmp.ne.s32.totalorder %s207, %s210
      %p219 = scmp.eq.s32.totalorder %s23, 1
      %p220 = por %p218, %p219
      %p221 = scmp.ne.s32.totalorder %s210, %s211
      %p222 = scmp.eq.s32.totalorder %s23, 0
      %p223 = por %p221, %p222
      %p224 = scmp.ne.s32.totalorder %s210, %s211
      %p225 = scmp.eq.s32.totalorder %s24, 1
      %p226 = por %p224, %p225
      %p228 = scmp.ne.s32.totalorder %s211, %s227
      %p229 = scmp.eq.s32.totalorder %s24, 0
      %p230 = por %p228, %p229
      %s231 = sadd.s32 %s25, %s26
      %s232 = sadd.s32 %s44, %s40
      %s233 = ssub.s32 %s231, %s232
      %p234 = scmp.eq.s32.totalorder %s233, 0
      %s236 = sadd.s32 %s235, 1
      %s237 = scalar_select %p234, %s235, %s236
      %p240 = pneg %p234
      %p241 = scmp.eq.s32.totalorder %s18, 1
      %p242 = por %p240, %p241
      %p243 = scmp.ne.s32.totalorder %s235, %s238
      %p244 = scmp.eq.s32.totalorder %s18, 0
      %p245 = por %p243, %p244
      %p246 = scmp.ne.s32.totalorder %s235, %s238
      %p247 = scmp.eq.s32.totalorder %s23, 1
      %p248 = por %p246, %p247
      %p249 = scmp.ne.s32.totalorder %s238, %s239
      %p250 = scmp.eq.s32.totalorder %s23, 0
      %p251 = por %p249, %p250
      %p252 = scmp.ne.s32.totalorder %s238, %s239
      %p253 = scmp.eq.s32.totalorder %s24, 1
      %p254 = por %p252, %p253
      %p256 = scmp.ne.s32.totalorder %s239, %s255
      %p257 = scmp.eq.s32.totalorder %s24, 0
      %p258 = por %p256, %p257
      %p259 = scmp.le.s32.totalorder 1, %s18
      %p260 = scmp.lt.s32.totalorder %s18, 3
      %p261 = pnand %p259, %p260
      %p262 = pneg %p261
      // Predicated region
      $region9: #{pointcloud_backbone.1} parent=5 // pred_check
        _
      $region10: #{pointcloud_backbone.1} parent=5 // pred_check_branch
        %264 = sbr.rel (%p261) target = $region12
      $region11: #{pointcloud_backbone.1} parent=5 // pred_region
        %s265 = ssub.s32 %s18, 1
        // Predicated region
        $region13: #{pointcloud_backbone.1} parent=11 // pred_check
          %p266 = pneg %p88
        $region14: #{pointcloud_backbone.1} parent=11 // pred_check_branch
          %268 = sbr.rel (%p266) target = $region16
        $region15: #{pointcloud_backbone.1} parent=11 // pred_region
          _
        $region16: #{pointcloud_backbone.1} parent=11 // pred_fallthru
          _
        // Predicated region
        $region17: #{pointcloud_backbone.1} parent=11 // pred_check
          %p269 = pneg %p109
        $region18: #{pointcloud_backbone.1} parent=11 // pred_check_branch
          %271 = sbr.rel (%p269) target = $region20
        $region19: #{pointcloud_backbone.1} parent=11 // pred_region
          _
        $region20: #{pointcloud_backbone.1} parent=11 // pred_fallthru
          _
        // Predicated region
        $region21: #{pointcloud_backbone.1} parent=11 // pred_check
          %p272 = pneg %p130
        $region22: #{pointcloud_backbone.1} parent=11 // pred_check_branch
          %274 = sbr.rel (%p272) target = $region24
        $region23: #{pointcloud_backbone.1} parent=11 // pred_region
          _
        $region24: #{pointcloud_backbone.1} parent=11 // pred_fallthru
          _
        // Predicated region
        $region25: #{pointcloud_backbone.1} parent=11 // pred_check
          %p275 = pneg %p151
        $region26: #{pointcloud_backbone.1} parent=11 // pred_check_branch
          %277 = sbr.rel (%p275) target = $region28
        $region27: #{pointcloud_backbone.1} parent=11 // pred_region
          _
        $region28: #{pointcloud_backbone.1} parent=11 // pred_fallthru
          _
        // Predicated region
        $region29: #{pointcloud_backbone.1} parent=11 // pred_check
          %p278 = pneg %p172
        $region30: #{pointcloud_backbone.1} parent=11 // pred_check_branch
          %280 = sbr.rel (%p278) target = $region32
        $region31: #{pointcloud_backbone.1} parent=11 // pred_region
          _
        $region32: #{pointcloud_backbone.1} parent=11 // pred_fallthru
          _
        // Predicated region
        $region33: #{pointcloud_backbone.1} parent=11 // pred_check
          %p281 = pneg %p193
        $region34: #{pointcloud_backbone.1} parent=11 // pred_check_branch
          %283 = sbr.rel (%p281) target = $region36
        $region35: #{pointcloud_backbone.1} parent=11 // pred_region
          _
        $region36: #{pointcloud_backbone.1} parent=11 // pred_fallthru
          _
      $region12: #{pointcloud_backbone.1} parent=5 // pred_fallthru
        _
      %p284 = scmp.lt.s32.totalorder %s18, 2
      // Predicated region
      $region37: #{pointcloud_backbone.1} parent=5 // pred_check
        %p285 = pneg %p284
      $region38: #{pointcloud_backbone.1} parent=5 // pred_check_branch
        %287 = sbr.rel (%p285) target = $region40
      $region39: #{pointcloud_backbone.1} parent=5 // pred_region
        // Predicated region
        $region41: #{pointcloud_backbone.1} parent=39 // pred_check
          %p288 = pneg %p61
        $region42: #{pointcloud_backbone.1} parent=39 // pred_check_branch
          %290 = sbr.rel (%p288) target = $region44
        $region43: #{pointcloud_backbone.1} parent=39 // pred_region
          %s291 = sadd.s32 %s26, %s27
          %s292 = smul.u32 32, %s291
          %p293 = scmp.lt.s32.totalorder %s25, 1
          %s294 = scalar_select %p293, %s25, 1
          %p295 = scmp.lt.s32.totalorder %s292, 31
          %s296 = scalar_select %p295, %s292, 31
          %s297 = smul.addr %s294, 32
          %s298 = sadd.s32 %s296, %s297
          %s299 = smul.addr %s298, 8
          %s300 = scalar_lea.vmem %s0, %s299
          %s301 = sadd.s32 %s26, %s27
          %s302 = smul.u32 32, %s301
        $region44: #{pointcloud_backbone.1} parent=39 // pred_fallthru
          _
      $region40: #{pointcloud_backbone.1} parent=5 // pred_fallthru
        _
      %p303 = scmp.le.s32.totalorder 1, %s18
      %p304 = scmp.lt.s32.totalorder %s18, 3
      %p305 = pnand %p303, %p304
      %p306 = pneg %p305
      // Predicated region
      $region45: #{pointcloud_backbone.1} parent=5 // pred_check
        _
      $region46: #{pointcloud_backbone.1} parent=5 // pred_check_branch
        %308 = sbr.rel (%p305) target = $region48
      $region47: #{pointcloud_backbone.1} parent=5 // pred_region
        %s309 = ssub.s32 %s18, 1
        %s310 = sadd.s32 %s29, %s30
        %s311 = smul.u32 32, %s310
        %p312 = scmp.lt.s32.totalorder %s28, 1
        %s313 = scalar_select %p312, %s28, 1
        %p314 = scmp.lt.s32.totalorder %s311, 31
        %s315 = scalar_select %p314, %s311, 31
        %s316 = smul.addr %s313, 32
        %s317 = sadd.s32 %s315, %s316
        %s318 = smul.addr %s317, 8
        %s319 = scalar_lea.vmem %s0, %s318
        %p320 = pneg %p67
        %p321 = pneg %p64
        %p322 = pneg %p88
        %p323 = pneg %p85
        %p324 = pneg %p109
        %p325 = pneg %p106
        %p326 = pneg %p130
        %p327 = pneg %p127
        %p328 = pneg %p151
        %p329 = pneg %p148
        %p330 = pneg %p172
        %p331 = pneg %p169
        %p332 = pneg %p193
        %p333 = pneg %p190
        %p334 = pneg %p223
        %p335 = pneg %p220
        %s336 = sand.u32 %s210, 1
        %s337 = scalar_lea.sflag [#allocation3], %s336
        %s338 = sand.u32 %s210, 1
        %s339 = smul.addr %s338, 256
        %s340 = scalar_lea.vmem [#allocation2], %s339
        %p341 = pneg %p251
        %p342 = pneg %p248
        %s343 = sadd.s32 %s28, %s29
        %p344 = scmp.lt.s32.totalorder %s343, 1
        %s345 = scalar_select %p344, %s343, 1
        %s346 = smul.addr %s345, 2
        %s347 = scalar_lea.vmem %s8, %s346
        %s348 = sadd.s32 %s29, %s30
        %s349 = smul.u32 32, %s348
        %p350 = scmp.lt.s32.totalorder %s28, 1
        %s351 = scalar_select %p350, %s28, 1
        %p352 = scmp.lt.s32.totalorder %s349, 31
        %s353 = scalar_select %p352, %s349, 31
        %s354 = smul.addr %s351, 32
        %s355 = sadd.s32 %s353, %s354
        %s356 = smul.addr %s355, 8
        %s357 = scalar_lea.vmem %s0, %s356
        %s358 = sadd.s32 %s29, %s30
        %s359 = smul.u32 32, %s358
        %s360 = sadd.s32 %s29, %s30
        %s361 = smul.u32 32, %s360
        %s362 = sadd.s32 %s28, %s29
        %p363 = scmp.lt.s32.totalorder %s362, 1
        %s364 = scalar_select %p363, %s362, 1
        %s365 = smul.addr %s364, 2
        %s366 = scalar_lea.vmem %s8, %s365
        %s367 = sadd.s32 %s28, %s29
        %v369 = vld [vmem:[%s357] sm:$0xff]
        %v370 = vld [vmem:[%s357 + $0x8] sm:$0xff]
        %v371 = vld [vmem:[%s357 + $0x10] sm:$0xff]
        %v372 = vld [vmem:[%s357 + $0x18] sm:$0xff]
        %v373 = vld [vmem:[%s357 + $0x20] sm:$0xff]
        %v374 = vld [vmem:[%s357 + $0x28] sm:$0xff]
        %v375 = vld [vmem:[%s357 + $0x30] sm:$0xff]
        %v376 = vld [vmem:[%s357 + $0x38] sm:$0xff]
        %v377 = vld [vmem:[%s357 + $0x40] sm:$0xff]
        %v378 = vld [vmem:[%s357 + $0x48] sm:$0xff]
        %v379 = vld [vmem:[%s357 + $0x50] sm:$0xff]
        %v380 = vld [vmem:[%s357 + $0x58] sm:$0xff]
        %v381 = vld [vmem:[%s357 + $0x60] sm:$0xff]
        %v382 = vld [vmem:[%s357 + $0x68] sm:$0xff]
        %v383 = vld [vmem:[%s357 + $0x70] sm:$0xff]
        %v384 = vld [vmem:[%s357 + $0x78] sm:$0xff]
        %v385 = vld [vmem:[%s357 + $0x80] sm:$0xff]
        %v386 = vld [vmem:[%s357 + $0x88] sm:$0xff]
        %v387 = vld [vmem:[%s357 + $0x90] sm:$0xff]
        %v388 = vld [vmem:[%s357 + $0x98] sm:$0xff]
        %v389 = vld [vmem:[%s357 + $0xa0] sm:$0xff]
        %v390 = vld [vmem:[%s357 + $0xa8] sm:$0xff]
        %v391 = vld [vmem:[%s357 + $0xb0] sm:$0xff]
        %v392 = vld [vmem:[%s357 + $0xb8] sm:$0xff]
        %v393 = vld [vmem:[%s357 + $0xc0] sm:$0xff]
        %v394 = vld [vmem:[%s357 + $0xc8] sm:$0xff]
        %v395 = vld [vmem:[%s357 + $0xd0] sm:$0xff]
        %v396 = vld [vmem:[%s357 + $0xd8] sm:$0xff]
        %v397 = vld [vmem:[%s357 + $0xe0] sm:$0xff]
        %v398 = vld [vmem:[%s357 + $0xe8] sm:$0xff]
        %v399 = vld [vmem:[%s357 + $0xf0] sm:$0xff]
        %v400 = vld [vmem:[%s357 + $0xf8] sm:$0xff]
        %v401 = vld [vmem:[%s1] sm:$0x1]
        %403 = vset.pattern.permute.xlu0 0
        %404 = vperm.xlu0 %403, %v369
        %v405 = vpop.permute.xlu0 %404
        %408 = vset.pattern.permute.xlu0 0
        %409 = vperm.xlu0 %408, %v370
        %v410 = vpop.permute.xlu0 %409
        %413 = vset.pattern.permute.xlu0 0
        %414 = vperm.xlu0 %413, %v371
        %v415 = vpop.permute.xlu0 %414
        %418 = vset.pattern.permute.xlu0 0
        %419 = vperm.xlu0 %418, %v372
        %v420 = vpop.permute.xlu0 %419
        %423 = vset.pattern.permute.xlu0 0
        %424 = vperm.xlu0 %423, %v373
        %v425 = vpop.permute.xlu0 %424
        %428 = vset.pattern.permute.xlu0 0
        %429 = vperm.xlu0 %428, %v374
        %v430 = vpop.permute.xlu0 %429
        %433 = vset.pattern.permute.xlu0 0
        %434 = vperm.xlu0 %433, %v375
        %v435 = vpop.permute.xlu0 %434
        %438 = vset.pattern.permute.xlu0 0
        %439 = vperm.xlu0 %438, %v376
        %v440 = vpop.permute.xlu0 %439
        %443 = vset.pattern.permute.xlu0 0
        %444 = vperm.xlu0 %443, %v377
        %v445 = vpop.permute.xlu0 %444
        %448 = vset.pattern.permute.xlu0 0
        %449 = vperm.xlu0 %448, %v378
        %v450 = vpop.permute.xlu0 %449
        %453 = vset.pattern.permute.xlu0 0
        %454 = vperm.xlu0 %453, %v379
        %v455 = vpop.permute.xlu0 %454
        %458 = vset.pattern.permute.xlu0 0
        %459 = vperm.xlu0 %458, %v380
        %v460 = vpop.permute.xlu0 %459
        %463 = vset.pattern.permute.xlu0 0
        %464 = vperm.xlu0 %463, %v381
        %v465 = vpop.permute.xlu0 %464
        %468 = vset.pattern.permute.xlu0 0
        %469 = vperm.xlu0 %468, %v382
        %v470 = vpop.permute.xlu0 %469
        %473 = vset.pattern.permute.xlu0 0
        %474 = vperm.xlu0 %473, %v383
        %v475 = vpop.permute.xlu0 %474
        %478 = vset.pattern.permute.xlu0 0
        %479 = vperm.xlu0 %478, %v384
        %v480 = vpop.permute.xlu0 %479
        %483 = vset.pattern.permute.xlu0 0
        %484 = vperm.xlu0 %483, %v385
        %v485 = vpop.permute.xlu0 %484
        %488 = vset.pattern.permute.xlu0 0
        %489 = vperm.xlu0 %488, %v386
        %v490 = vpop.permute.xlu0 %489
        %493 = vset.pattern.permute.xlu0 0
        %494 = vperm.xlu0 %493, %v387
        %v495 = vpop.permute.xlu0 %494
        %498 = vset.pattern.permute.xlu0 0
        %499 = vperm.xlu0 %498, %v388
        %v500 = vpop.permute.xlu0 %499
        %503 = vset.pattern.permute.xlu0 0
        %504 = vperm.xlu0 %503, %v389
        %v505 = vpop.permute.xlu0 %504
        %508 = vset.pattern.permute.xlu0 0
        %509 = vperm.xlu0 %508, %v390
        %v510 = vpop.permute.xlu0 %509
        %513 = vset.pattern.permute.xlu0 0
        %514 = vperm.xlu0 %513, %v391
        %v515 = vpop.permute.xlu0 %514
        %518 = vset.pattern.permute.xlu0 0
        %519 = vperm.xlu0 %518, %v392
        %v520 = vpop.permute.xlu0 %519
        %523 = vset.pattern.permute.xlu0 0
        %524 = vperm.xlu0 %523, %v393
        %v525 = vpop.permute.xlu0 %524
        %528 = vset.pattern.permute.xlu0 0
        %529 = vperm.xlu0 %528, %v394
        %v530 = vpop.permute.xlu0 %529
        %533 = vset.pattern.permute.xlu0 0
        %534 = vperm.xlu0 %533, %v395
        %v535 = vpop.permute.xlu0 %534
        %538 = vset.pattern.permute.xlu0 0
        %539 = vperm.xlu0 %538, %v396
        %v540 = vpop.permute.xlu0 %539
        %543 = vset.pattern.permute.xlu0 0
        %544 = vperm.xlu0 %543, %v397
        %v545 = vpop.permute.xlu0 %544
        %548 = vset.pattern.permute.xlu0 0
        %549 = vperm.xlu0 %548, %v398
        %v550 = vpop.permute.xlu0 %549
        %553 = vset.pattern.permute.xlu0 0
        %554 = vperm.xlu0 %553, %v399
        %v555 = vpop.permute.xlu0 %554
        %558 = vset.pattern.permute.xlu0 0
        %559 = vperm.xlu0 %558, %v400
        %v560 = vpop.permute.xlu0 %559
        %v562 = vlaneseq
        %v563 = vshrl.u32 %v562, 7
        %v564 = vsub.s32 0, %v563
        %v565 = vrot.slane %v401, %v564
        %v566 = vmul.f32 %v405, %v565
        %v567 = vmul.f32 %v410, %v565
        %v568 = vmul.f32 %v415, %v565
        %v569 = vmul.f32 %v420, %v565
        %v570 = vmul.f32 %v425, %v565
        %v571 = vmul.f32 %v430, %v565
        %v572 = vmul.f32 %v435, %v565
        %v573 = vmul.f32 %v440, %v565
        %v574 = vmul.f32 %v445, %v565
        %v575 = vmul.f32 %v450, %v565
        %v576 = vmul.f32 %v455, %v565
        %v577 = vmul.f32 %v460, %v565
        %v578 = vmul.f32 %v465, %v565
        %v579 = vmul.f32 %v470, %v565
        %v580 = vmul.f32 %v475, %v565
        %v581 = vmul.f32 %v480, %v565
        %v582 = vmul.f32 %v485, %v565
        %v583 = vmul.f32 %v490, %v565
        %v584 = vmul.f32 %v495, %v565
        %v585 = vmul.f32 %v500, %v565
        %v586 = vmul.f32 %v505, %v565
        %v587 = vmul.f32 %v510, %v565
        %v588 = vmul.f32 %v515, %v565
        %v589 = vmul.f32 %v520, %v565
        %v590 = vmul.f32 %v525, %v565
        %v591 = vmul.f32 %v530, %v565
        %v592 = vmul.f32 %v535, %v565
        %v593 = vmul.f32 %v540, %v565
        %v594 = vmul.f32 %v545, %v565
        %v595 = vmul.f32 %v550, %v565
        %v596 = vmul.f32 %v555, %v565
        %v597 = vmul.f32 %v560, %v565
        %v598 = vld [vmem:[%s1 + $0x1] sm:$0x1]
        %599 = vset.pattern.permute.xlu0 1
        %600 = vperm.xlu0 %599, %v369
        %v601 = vpop.permute.xlu0 %600
        %603 = vset.pattern.permute.xlu0 1
        %604 = vperm.xlu0 %603, %v370
        %v605 = vpop.permute.xlu0 %604
        %607 = vset.pattern.permute.xlu0 1
        %608 = vperm.xlu0 %607, %v371
        %v609 = vpop.permute.xlu0 %608
        %611 = vset.pattern.permute.xlu0 1
        %612 = vperm.xlu0 %611, %v372
        %v613 = vpop.permute.xlu0 %612
        %615 = vset.pattern.permute.xlu0 1
        %616 = vperm.xlu0 %615, %v373
        %v617 = vpop.permute.xlu0 %616
        %619 = vset.pattern.permute.xlu0 1
        %620 = vperm.xlu0 %619, %v374
        %v621 = vpop.permute.xlu0 %620
        %623 = vset.pattern.permute.xlu0 1
        %624 = vperm.xlu0 %623, %v375
        %v625 = vpop.permute.xlu0 %624
        %627 = vset.pattern.permute.xlu0 1
        %628 = vperm.xlu0 %627, %v376
        %v629 = vpop.permute.xlu0 %628
        %631 = vset.pattern.permute.xlu0 1
        %632 = vperm.xlu0 %631, %v377
        %v633 = vpop.permute.xlu0 %632
        %635 = vset.pattern.permute.xlu0 1
        %636 = vperm.xlu0 %635, %v378
        %v637 = vpop.permute.xlu0 %636
        %639 = vset.pattern.permute.xlu0 1
        %640 = vperm.xlu0 %639, %v379
        %v641 = vpop.permute.xlu0 %640
        %643 = vset.pattern.permute.xlu0 1
        %644 = vperm.xlu0 %643, %v380
        %v645 = vpop.permute.xlu0 %644
        %647 = vset.pattern.permute.xlu0 1
        %648 = vperm.xlu0 %647, %v381
        %v649 = vpop.permute.xlu0 %648
        %651 = vset.pattern.permute.xlu0 1
        %652 = vperm.xlu0 %651, %v382
        %v653 = vpop.permute.xlu0 %652
        %655 = vset.pattern.permute.xlu0 1
        %656 = vperm.xlu0 %655, %v383
        %v657 = vpop.permute.xlu0 %656
        %659 = vset.pattern.permute.xlu0 1
        %660 = vperm.xlu0 %659, %v384
        %v661 = vpop.permute.xlu0 %660
        %663 = vset.pattern.permute.xlu0 1
        %664 = vperm.xlu0 %663, %v385
        %v665 = vpop.permute.xlu0 %664
        %667 = vset.pattern.permute.xlu0 1
        %668 = vperm.xlu0 %667, %v386
        %v669 = vpop.permute.xlu0 %668
        %671 = vset.pattern.permute.xlu0 1
        %672 = vperm.xlu0 %671, %v387
        %v673 = vpop.permute.xlu0 %672
        %675 = vset.pattern.permute.xlu0 1
        %676 = vperm.xlu0 %675, %v388
        %v677 = vpop.permute.xlu0 %676
        %679 = vset.pattern.permute.xlu0 1
        %680 = vperm.xlu0 %679, %v389
        %v681 = vpop.permute.xlu0 %680
        %683 = vset.pattern.permute.xlu0 1
        %684 = vperm.xlu0 %683, %v390
        %v685 = vpop.permute.xlu0 %684
        %687 = vset.pattern.permute.xlu0 1
        %688 = vperm.xlu0 %687, %v391
        %v689 = vpop.permute.xlu0 %688
        %691 = vset.pattern.permute.xlu0 1
        %692 = vperm.xlu0 %691, %v392
        %v693 = vpop.permute.xlu0 %692
        %695 = vset.pattern.permute.xlu0 1
        %696 = vperm.xlu0 %695, %v393
        %v697 = vpop.permute.xlu0 %696
        %699 = vset.pattern.permute.xlu0 1
        %700 = vperm.xlu0 %699, %v394
        %v701 = vpop.permute.xlu0 %700
        %703 = vset.pattern.permute.xlu0 1
        %704 = vperm.xlu0 %703, %v395
        %v705 = vpop.permute.xlu0 %704
        %707 = vset.pattern.permute.xlu0 1
        %708 = vperm.xlu0 %707, %v396
        %v709 = vpop.permute.xlu0 %708
        %711 = vset.pattern.permute.xlu0 1
        %712 = vperm.xlu0 %711, %v397
        %v713 = vpop.permute.xlu0 %712
        %715 = vset.pattern.permute.xlu0 1
        %716 = vperm.xlu0 %715, %v398
        %v717 = vpop.permute.xlu0 %716
        %719 = vset.pattern.permute.xlu0 1
        %720 = vperm.xlu0 %719, %v399
        %v721 = vpop.permute.xlu0 %720
        %723 = vset.pattern.permute.xlu0 1
        %724 = vperm.xlu0 %723, %v400
        %v725 = vpop.permute.xlu0 %724
        %v727 = vlaneseq
        %v728 = vshrl.u32 %v727, 7
        %v729 = vsub.s32 0, %v728
        %v730 = vrot.slane %v598, %v729
        %v731 = vmul.f32 %v601, %v730
        %v732 = vmul.f32 %v605, %v730
        %v733 = vmul.f32 %v609, %v730
        %v734 = vmul.f32 %v613, %v730
        %v735 = vmul.f32 %v617, %v730
        %v736 = vmul.f32 %v621, %v730
        %v737 = vmul.f32 %v625, %v730
        %v738 = vmul.f32 %v629, %v730
        %v739 = vmul.f32 %v633, %v730
        %v740 = vmul.f32 %v637, %v730
        %v741 = vmul.f32 %v641, %v730
        %v742 = vmul.f32 %v645, %v730
        %v743 = vmul.f32 %v649, %v730
        %v744 = vmul.f32 %v653, %v730
        %v745 = vmul.f32 %v657, %v730
        %v746 = vmul.f32 %v661, %v730
        %v747 = vmul.f32 %v665, %v730
        %v748 = vmul.f32 %v669, %v730
        %v749 = vmul.f32 %v673, %v730
        %v750 = vmul.f32 %v677, %v730
        %v751 = vmul.f32 %v681, %v730
        %v752 = vmul.f32 %v685, %v730
        %v753 = vmul.f32 %v689, %v730
        %v754 = vmul.f32 %v693, %v730
        %v755 = vmul.f32 %v697, %v730
        %v756 = vmul.f32 %v701, %v730
        %v757 = vmul.f32 %v705, %v730
        %v758 = vmul.f32 %v709, %v730
        %v759 = vmul.f32 %v713, %v730
        %v760 = vmul.f32 %v717, %v730
        %v761 = vmul.f32 %v721, %v730
        %v762 = vmul.f32 %v725, %v730
        %v763 = vadd.f32 %v566, %v731
        %v764 = vadd.f32 %v567, %v732
        %v765 = vadd.f32 %v568, %v733
        %v766 = vadd.f32 %v569, %v734
        %v767 = vadd.f32 %v570, %v735
        %v768 = vadd.f32 %v571, %v736
        %v769 = vadd.f32 %v572, %v737
        %v770 = vadd.f32 %v573, %v738
        %v771 = vadd.f32 %v574, %v739
        %v772 = vadd.f32 %v575, %v740
        %v773 = vadd.f32 %v576, %v741
        %v774 = vadd.f32 %v577, %v742
        %v775 = vadd.f32 %v578, %v743
        %v776 = vadd.f32 %v579, %v744
        %v777 = vadd.f32 %v580, %v745
        %v778 = vadd.f32 %v581, %v746
        %v779 = vadd.f32 %v582, %v747
        %v780 = vadd.f32 %v583, %v748
        %v781 = vadd.f32 %v584, %v749
        %v782 = vadd.f32 %v585, %v750
        %v783 = vadd.f32 %v586, %v751
        %v784 = vadd.f32 %v587, %v752
        %v785 = vadd.f32 %v588, %v753
        %v786 = vadd.f32 %v589, %v754
        %v787 = vadd.f32 %v590, %v755
        %v788 = vadd.f32 %v591, %v756
        %v789 = vadd.f32 %v592, %v757
        %v790 = vadd.f32 %v593, %v758
        %v791 = vadd.f32 %v594, %v759
        %v792 = vadd.f32 %v595, %v760
        %v793 = vadd.f32 %v596, %v761
        %v794 = vadd.f32 %v597, %v762
        %v795 = vld [vmem:[%s1 + $0x2] sm:$0x1]
        %796 = vset.pattern.permute.xlu0 2
        %797 = vperm.xlu0 %796, %v369
        %v798 = vpop.permute.xlu0 %797
        %800 = vset.pattern.permute.xlu0 2
        %801 = vperm.xlu0 %800, %v370
        %v802 = vpop.permute.xlu0 %801
        %804 = vset.pattern.permute.xlu0 2
        %805 = vperm.xlu0 %804, %v371
        %v806 = vpop.permute.xlu0 %805
        %808 = vset.pattern.permute.xlu0 2
        %809 = vperm.xlu0 %808, %v372
        %v810 = vpop.permute.xlu0 %809
        %812 = vset.pattern.permute.xlu0 2
        %813 = vperm.xlu0 %812, %v373
        %v814 = vpop.permute.xlu0 %813
        %816 = vset.pattern.permute.xlu0 2
        %817 = vperm.xlu0 %816, %v374
        %v818 = vpop.permute.xlu0 %817
        %820 = vset.pattern.permute.xlu0 2
        %821 = vperm.xlu0 %820, %v375
        %v822 = vpop.permute.xlu0 %821
        %824 = vset.pattern.permute.xlu0 2
        %825 = vperm.xlu0 %824, %v376
        %v826 = vpop.permute.xlu0 %825
        %828 = vset.pattern.permute.xlu0 2
        %829 = vperm.xlu0 %828, %v377
        %v830 = vpop.permute.xlu0 %829
        %832 = vset.pattern.permute.xlu0 2
        %833 = vperm.xlu0 %832, %v378
        %v834 = vpop.permute.xlu0 %833
        %836 = vset.pattern.permute.xlu0 2
        %837 = vperm.xlu0 %836, %v379
        %v838 = vpop.permute.xlu0 %837
        %840 = vset.pattern.permute.xlu0 2
        %841 = vperm.xlu0 %840, %v380
        %v842 = vpop.permute.xlu0 %841
        %844 = vset.pattern.permute.xlu0 2
        %845 = vperm.xlu0 %844, %v381
        %v846 = vpop.permute.xlu0 %845
        %848 = vset.pattern.permute.xlu0 2
        %849 = vperm.xlu0 %848, %v382
        %v850 = vpop.permute.xlu0 %849
        %852 = vset.pattern.permute.xlu0 2
        %853 = vperm.xlu0 %852, %v383
        %v854 = vpop.permute.xlu0 %853
        %856 = vset.pattern.permute.xlu0 2
        %857 = vperm.xlu0 %856, %v384
        %v858 = vpop.permute.xlu0 %857
        %860 = vset.pattern.permute.xlu0 2
        %861 = vperm.xlu0 %860, %v385
        %v862 = vpop.permute.xlu0 %861
        %864 = vset.pattern.permute.xlu0 2
        %865 = vperm.xlu0 %864, %v386
        %v866 = vpop.permute.xlu0 %865
        %868 = vset.pattern.permute.xlu0 2
        %869 = vperm.xlu0 %868, %v387
        %v870 = vpop.permute.xlu0 %869
        %872 = vset.pattern.permute.xlu0 2
        %873 = vperm.xlu0 %872, %v388
        %v874 = vpop.permute.xlu0 %873
        %876 = vset.pattern.permute.xlu0 2
        %877 = vperm.xlu0 %876, %v389
        %v878 = vpop.permute.xlu0 %877
        %880 = vset.pattern.permute.xlu0 2
        %881 = vperm.xlu0 %880, %v390
        %v882 = vpop.permute.xlu0 %881
        %884 = vset.pattern.permute.xlu0 2
        %885 = vperm.xlu0 %884, %v391
        %v886 = vpop.permute.xlu0 %885
        %888 = vset.pattern.permute.xlu0 2
        %889 = vperm.xlu0 %888, %v392
        %v890 = vpop.permute.xlu0 %889
        %892 = vset.pattern.permute.xlu0 2
        %893 = vperm.xlu0 %892, %v393
        %v894 = vpop.permute.xlu0 %893
        %896 = vset.pattern.permute.xlu0 2
        %897 = vperm.xlu0 %896, %v394
        %v898 = vpop.permute.xlu0 %897
        %900 = vset.pattern.permute.xlu0 2
        %901 = vperm.xlu0 %900, %v395
        %v902 = vpop.permute.xlu0 %901
        %904 = vset.pattern.permute.xlu0 2
        %905 = vperm.xlu0 %904, %v396
        %v906 = vpop.permute.xlu0 %905
        %908 = vset.pattern.permute.xlu0 2
        %909 = vperm.xlu0 %908, %v397
        %v910 = vpop.permute.xlu0 %909
        %912 = vset.pattern.permute.xlu0 2
        %913 = vperm.xlu0 %912, %v398
        %v914 = vpop.permute.xlu0 %913
        %916 = vset.pattern.permute.xlu0 2
        %917 = vperm.xlu0 %916, %v399
        %v918 = vpop.permute.xlu0 %917
        %920 = vset.pattern.permute.xlu0 2
        %921 = vperm.xlu0 %920, %v400
        %v922 = vpop.permute.xlu0 %921
        %v924 = vlaneseq
        %v925 = vshrl.u32 %v924, 7
        %v926 = vsub.s32 0, %v925
        %v927 = vrot.slane %v795, %v926
        %v928 = vmul.f32 %v798, %v927
        %v929 = vmul.f32 %v802, %v927
        %v930 = vmul.f32 %v806, %v927
        %v931 = vmul.f32 %v810, %v927
        %v932 = vmul.f32 %v814, %v927
        %v933 = vmul.f32 %v818, %v927
        %v934 = vmul.f32 %v822, %v927
        %v935 = vmul.f32 %v826, %v927
        %v936 = vmul.f32 %v830, %v927
        %v937 = vmul.f32 %v834, %v927
        %v938 = vmul.f32 %v838, %v927
        %v939 = vmul.f32 %v842, %v927
        %v940 = vmul.f32 %v846, %v927
        %v941 = vmul.f32 %v850, %v927
        %v942 = vmul.f32 %v854, %v927
        %v943 = vmul.f32 %v858, %v927
        %v944 = vmul.f32 %v862, %v927
        %v945 = vmul.f32 %v866, %v927
        %v946 = vmul.f32 %v870, %v927
        %v947 = vmul.f32 %v874, %v927
        %v948 = vmul.f32 %v878, %v927
        %v949 = vmul.f32 %v882, %v927
        %v950 = vmul.f32 %v886, %v927
        %v951 = vmul.f32 %v890, %v927
        %v952 = vmul.f32 %v894, %v927
        %v953 = vmul.f32 %v898, %v927
        %v954 = vmul.f32 %v902, %v927
        %v955 = vmul.f32 %v906, %v927
        %v956 = vmul.f32 %v910, %v927
        %v957 = vmul.f32 %v914, %v927
        %v958 = vmul.f32 %v918, %v927
        %v959 = vmul.f32 %v922, %v927
        %v960 = vadd.f32 %v763, %v928
        %v961 = vadd.f32 %v764, %v929
        %v962 = vadd.f32 %v765, %v930
        %v963 = vadd.f32 %v766, %v931
        %v964 = vadd.f32 %v767, %v932
        %v965 = vadd.f32 %v768, %v933
        %v966 = vadd.f32 %v769, %v934
        %v967 = vadd.f32 %v770, %v935
        %v968 = vadd.f32 %v771, %v936
        %v969 = vadd.f32 %v772, %v937
        %v970 = vadd.f32 %v773, %v938
        %v971 = vadd.f32 %v774, %v939
        %v972 = vadd.f32 %v775, %v940
        %v973 = vadd.f32 %v776, %v941
        %v974 = vadd.f32 %v777, %v942
        %v975 = vadd.f32 %v778, %v943
        %v976 = vadd.f32 %v779, %v944
        %v977 = vadd.f32 %v780, %v945
        %v978 = vadd.f32 %v781, %v946
        %v979 = vadd.f32 %v782, %v947
        %v980 = vadd.f32 %v783, %v948
        %v981 = vadd.f32 %v784, %v949
        %v982 = vadd.f32 %v785, %v950
        %v983 = vadd.f32 %v786, %v951
        %v984 = vadd.f32 %v787, %v952
        %v985 = vadd.f32 %v788, %v953
        %v986 = vadd.f32 %v789, %v954
        %v987 = vadd.f32 %v790, %v955
        %v988 = vadd.f32 %v791, %v956
        %v989 = vadd.f32 %v792, %v957
        %v990 = vadd.f32 %v793, %v958
        %v991 = vadd.f32 %v794, %v959
        %v992 = vld [vmem:[%s2] sm:$0x1]
        %v994 = vlaneseq
        %v995 = vshrl.u32 %v994, 7
        %v996 = vsub.s32 0, %v995
        %v997 = vrot.slane %v992, %v996
        %v999 = vadd.f32 %v960, %v997
        %v1000 = vadd.f32 %v961, %v997
        %v1001 = vadd.f32 %v962, %v997
        %v1002 = vadd.f32 %v963, %v997
        %v1003 = vadd.f32 %v964, %v997
        %v1004 = vadd.f32 %v965, %v997
        %v1005 = vadd.f32 %v966, %v997
        %v1006 = vadd.f32 %v967, %v997
        %v1007 = vadd.f32 %v968, %v997
        %v1008 = vadd.f32 %v969, %v997
        %v1009 = vadd.f32 %v970, %v997
        %v1010 = vadd.f32 %v971, %v997
        %v1011 = vadd.f32 %v972, %v997
        %v1012 = vadd.f32 %v973, %v997
        %v1013 = vadd.f32 %v974, %v997
        %v1014 = vadd.f32 %v975, %v997
        %v1015 = vadd.f32 %v976, %v997
        %v1016 = vadd.f32 %v977, %v997
        %v1017 = vadd.f32 %v978, %v997
        %v1018 = vadd.f32 %v979, %v997
        %v1019 = vadd.f32 %v980, %v997
        %v1020 = vadd.f32 %v981, %v997
        %v1021 = vadd.f32 %v982, %v997
        %v1022 = vadd.f32 %v983, %v997
        %v1023 = vadd.f32 %v984, %v997
        %v1024 = vadd.f32 %v985, %v997
        %v1025 = vadd.f32 %v986, %v997
        %v1026 = vadd.f32 %v987, %v997
        %v1027 = vadd.f32 %v988, %v997
        %v1028 = vadd.f32 %v989, %v997
        %v1029 = vadd.f32 %v990, %v997
        %v1030 = vadd.f32 %v991, %v997
        %v1031 = vmax.f32 %v999, 0.0
        %v1032 = vmax.f32 %v1000, 0.0
        %v1033 = vmax.f32 %v1001, 0.0
        %v1034 = vmax.f32 %v1002, 0.0
        %v1035 = vmax.f32 %v1003, 0.0
        %v1036 = vmax.f32 %v1004, 0.0
        %v1037 = vmax.f32 %v1005, 0.0
        %v1038 = vmax.f32 %v1006, 0.0
        %v1039 = vmax.f32 %v1007, 0.0
        %v1040 = vmax.f32 %v1008, 0.0
        %v1041 = vmax.f32 %v1009, 0.0
        %v1042 = vmax.f32 %v1010, 0.0
        %v1043 = vmax.f32 %v1011, 0.0
        %v1044 = vmax.f32 %v1012, 0.0
        %v1045 = vmax.f32 %v1013, 0.0
        %v1046 = vmax.f32 %v1014, 0.0
        %v1047 = vmax.f32 %v1015, 0.0
        %v1048 = vmax.f32 %v1016, 0.0
        %v1049 = vmax.f32 %v1017, 0.0
        %v1050 = vmax.f32 %v1018, 0.0
        %v1051 = vmax.f32 %v1019, 0.0
        %v1052 = vmax.f32 %v1020, 0.0
        %v1053 = vmax.f32 %v1021, 0.0
        %v1054 = vmax.f32 %v1022, 0.0
        %v1055 = vmax.f32 %v1023, 0.0
        %v1056 = vmax.f32 %v1024, 0.0
        %v1057 = vmax.f32 %v1025, 0.0
        %v1058 = vmax.f32 %v1026, 0.0
        %v1059 = vmax.f32 %v1027, 0.0
        %v1060 = vmax.f32 %v1028, 0.0
        %v1061 = vmax.f32 %v1029, 0.0
        %v1062 = vmax.f32 %v1030, 0.0
        %v1063 = vpack.c.bf16 %v1032, %v1031
        %v1064 = vpack.c.bf16 %v1034, %v1033
        %v1065 = vpack.c.bf16 %v1036, %v1035
        %v1066 = vpack.c.bf16 %v1038, %v1037
        %v1067 = vpack.c.bf16 %v1040, %v1039
        %v1068 = vpack.c.bf16 %v1042, %v1041
        %v1069 = vpack.c.bf16 %v1044, %v1043
        %v1070 = vpack.c.bf16 %v1046, %v1045
        %v1071 = vpack.c.bf16 %v1048, %v1047
        %v1072 = vpack.c.bf16 %v1050, %v1049
        %v1073 = vpack.c.bf16 %v1052, %v1051
        %v1074 = vpack.c.bf16 %v1054, %v1053
        %v1075 = vpack.c.bf16 %v1056, %v1055
        %v1076 = vpack.c.bf16 %v1058, %v1057
        %v1077 = vpack.c.bf16 %v1060, %v1059
        %v1078 = vpack.c.bf16 %v1062, %v1061
        %v1079 = vld [vmem:[%s3] sm:$0xf]
        %v1080 = vld [vmem:[%s3 + $0x4] sm:$0xf]
        %v1081 = vld [vmem:[%s3 + $0x8] sm:$0xf]
        %v1082 = vld [vmem:[%s3 + $0xc] sm:$0xf]
        %v1083 = vld [vmem:[%s3 + $0x10] sm:$0xf]
        %v1084 = vld [vmem:[%s3 + $0x14] sm:$0xf]
        %v1085 = vld [vmem:[%s3 + $0x18] sm:$0xf]
        %v1086 = vld [vmem:[%s3 + $0x1c] sm:$0xf]
        %v1087 = vld [vmem:[%s4] sm:$0x1]
        %v1089 = vlaneseq
        %v1090 = vshrl.u32 %v1089, 7
        %v1091 = vsub.s32 0, %v1090
        %v1092 = vrot.slane %v1087, %v1091
        %v1102 = vunpack.c.l.b16 %v1079
        %v1103 = vunpack.c.l.b16 %v1080
        %v1104 = vunpack.c.l.b16 %v1081
        %v1105 = vunpack.c.l.b16 %v1082
        %v1106 = vunpack.c.l.b16 %v1083
        %v1107 = vunpack.c.l.b16 %v1084
        %v1108 = vunpack.c.l.b16 %v1085
        %v1109 = vunpack.c.l.b16 %v1086
        %v1110 = vpack.c.b16 %v1103, %v1102
        %v1111 = vpack.c.b16 %v1105, %v1104
        %v1112 = vpack.c.b16 %v1107, %v1106
        %v1113 = vpack.c.b16 %v1109, %v1108
        %vm1118 = vcmask 523264
        %v1120 = vsel %vm1118, %v1063, 0
        %v1123 = vsel %vm1118, %v1064, 0
        %v1126 = vsel %vm1118, %v1065, 0
        %v1129 = vsel %vm1118, %v1066, 0
        %v1132 = vsel %vm1118, %v1067, 0
        %v1135 = vsel %vm1118, %v1068, 0
        %v1138 = vsel %vm1118, %v1069, 0
        %v1141 = vsel %vm1118, %v1070, 0
        %v1144 = vsel %vm1118, %v1071, 0
        %v1147 = vsel %vm1118, %v1072, 0
        %v1150 = vsel %vm1118, %v1073, 0
        %v1153 = vsel %vm1118, %v1074, 0
        %v1156 = vsel %vm1118, %v1075, 0
        %v1159 = vsel %vm1118, %v1076, 0
        %v1162 = vsel %vm1118, %v1077, 0
        %v1165 = vsel %vm1118, %v1078, 0
        %1167 = vmatprep.subr.bf16.mxu0 0
        %1168 = vmatpush1.bf16.msra.mxu0 %v1110
        %1169 = vmatprep.subr.bf16.mxu0 0
        %1170 = vmatpush1.bf16.msra.mxu0 %v1111
        %1171 = vmatprep.subr.bf16.mxu0 0
        %1172 = vmatpush1.bf16.msra.mxu0 %v1112
        %1173 = vmatprep.subr.bf16.mxu0 0
        %1174 = vmatpush1.bf16.msra.mxu0 %v1113
        %1175 = vmatprep.subr.bf16.mxu0 0
        %1176 = vmatpush1.bf16.msra.mxu0 0
        %1177 = vmatprep.subr.bf16.mxu0 0
        %1178 = vmatpush1.bf16.msra.mxu0 0
        %1179 = vmatprep.subr.bf16.mxu0 0
        %1180 = vmatpush1.bf16.msra.mxu0 0
        %1181 = vmatprep.subr.bf16.mxu0 0
        %1182 = vmatpush1.bf16.msra.mxu0 0
        %1183 = vmatprep.subr.bf16.mxu0 0
        %1184 = vmatpush1.bf16.msra.mxu0 0
        %1185 = vmatprep.subr.bf16.mxu0 0
        %1186 = vmatpush1.bf16.msra.mxu0 0
        %1187 = vmatprep.subr.bf16.mxu0 0
        %1188 = vmatpush1.bf16.msra.mxu0 0
        %1189 = vmatprep.subr.bf16.mxu0 0
        %1190 = vmatpush1.bf16.msra.mxu0 0
        %1191 = vmatprep.subr.bf16.mxu0 0
        %1192 = vmatpush1.bf16.msra.mxu0 0
        %1193 = vmatprep.subr.bf16.mxu0 0
        %1194 = vmatpush1.bf16.msra.mxu0 0
        %1195 = vmatprep.subr.bf16.mxu0 0
        %1196 = vmatpush1.bf16.msra.mxu0 0
        %1197 = vmatprep.subr.bf16.mxu0 0
        %1198 = vmatpush1.bf16.msra.mxu0 0
        %1199 = vmatprep.mubr.bf16.mxu0 0
        %1200 = vmatmul.mubr.bf16.gmra.mrb[0].mxu0 %v1120
        %v1201 = vpop.f32.mrb[0].mxu0
        %v1202 = vadd.f32 %v1092, %v1201
        %v1203 = vpop.f32.mrb[0].mxu0
        %v1204 = vpop.f32.mrb[0].mxu0
        %v1205 = vadd.f32 %v1092, %v1204
        %v1206 = vpop.f32.mrb[0].mxu0
        %1207 = vmatprep.mubr.bf16.mxu0 0
        %1208 = vmatmul.mubr.bf16.gmra.mrb[0].mxu0 %v1123
        %v1209 = vpop.f32.mrb[0].mxu0
        %v1210 = vadd.f32 %v1092, %v1209
        %v1211 = vpop.f32.mrb[0].mxu0
        %v1212 = vpop.f32.mrb[0].mxu0
        %v1213 = vadd.f32 %v1092, %v1212
        %v1214 = vpop.f32.mrb[0].mxu0
        %1215 = vmatprep.mubr.bf16.mxu0 0
        %1216 = vmatmul.mubr.bf16.gmra.mrb[0].mxu0 %v1126
        %v1217 = vpop.f32.mrb[0].mxu0
        %v1218 = vadd.f32 %v1092, %v1217
        %v1219 = vpop.f32.mrb[0].mxu0
        %v1220 = vpop.f32.mrb[0].mxu0
        %v1221 = vadd.f32 %v1092, %v1220
        %v1222 = vpop.f32.mrb[0].mxu0
        %1223 = vmatprep.mubr.bf16.mxu0 0
        %1224 = vmatmul.mubr.bf16.gmra.mrb[0].mxu0 %v1129
        %v1225 = vpop.f32.mrb[0].mxu0
        %v1226 = vadd.f32 %v1092, %v1225
        %v1227 = vpop.f32.mrb[0].mxu0
        %v1228 = vpop.f32.mrb[0].mxu0
        %v1229 = vadd.f32 %v1092, %v1228
        %v1230 = vpop.f32.mrb[0].mxu0
        %1231 = vmatprep.mubr.bf16.mxu0 0
        %1232 = vmatmul.mubr.bf16.gmra.mrb[0].mxu0 %v1132
        %v1233 = vpop.f32.mrb[0].mxu0
        %v1234 = vadd.f32 %v1092, %v1233
        %v1235 = vpop.f32.mrb[0].mxu0
        %v1236 = vpop.f32.mrb[0].mxu0
        %v1237 = vadd.f32 %v1092, %v1236
        %v1238 = vpop.f32.mrb[0].mxu0
        %1239 = vmatprep.mubr.bf16.mxu0 0
        %1240 = vmatmul.mubr.bf16.gmra.mrb[0].mxu0 %v1135
        %v1241 = vpop.f32.mrb[0].mxu0
        %v1242 = vadd.f32 %v1092, %v1241
        %v1243 = vpop.f32.mrb[0].mxu0
        %v1244 = vpop.f32.mrb[0].mxu0
        %v1245 = vadd.f32 %v1092, %v1244
        %v1246 = vpop.f32.mrb[0].mxu0
        %1247 = vmatprep.mubr.bf16.mxu0 0
        %1248 = vmatmul.mubr.bf16.gmra.mrb[0].mxu0 %v1138
        %v1249 = vpop.f32.mrb[0].mxu0
        %v1250 = vadd.f32 %v1092, %v1249
        %v1251 = vpop.f32.mrb[0].mxu0
        %v1252 = vpop.f32.mrb[0].mxu0
        %v1253 = vadd.f32 %v1092, %v1252
        %v1254 = vpop.f32.mrb[0].mxu0
        %1255 = vmatprep.mubr.bf16.mxu0 0
        %1256 = vmatmul.mubr.bf16.gmra.mrb[0].mxu0 %v1141
        %v1257 = vpop.f32.mrb[0].mxu0
        %v1258 = vadd.f32 %v1092, %v1257
        %v1259 = vpop.f32.mrb[0].mxu0
        %v1260 = vpop.f32.mrb[0].mxu0
        %v1261 = vadd.f32 %v1092, %v1260
        %v1262 = vpop.f32.mrb[0].mxu0
        %1263 = vmatprep.mubr.bf16.mxu0 0
        %1264 = vmatmul.mubr.bf16.gmra.mrb[0].mxu0 %v1144
        %v1265 = vpop.f32.mrb[0].mxu0
        %v1266 = vadd.f32 %v1092, %v1265
        %v1267 = vpop.f32.mrb[0].mxu0
        %v1268 = vpop.f32.mrb[0].mxu0
        %v1269 = vadd.f32 %v1092, %v1268
        %v1270 = vpop.f32.mrb[0].mxu0
        %1271 = vmatprep.mubr.bf16.mxu0 0
        %1272 = vmatmul.mubr.bf16.gmra.mrb[0].mxu0 %v1147
        %v1273 = vpop.f32.mrb[0].mxu0
        %v1274 = vadd.f32 %v1092, %v1273
        %v1275 = vpop.f32.mrb[0].mxu0
        %v1276 = vpop.f32.mrb[0].mxu0
        %v1277 = vadd.f32 %v1092, %v1276
        %v1278 = vpop.f32.mrb[0].mxu0
        %1279 = vmatprep.mubr.bf16.mxu0 0
        %1280 = vmatmul.mubr.bf16.gmra.mrb[0].mxu0 %v1150
        %v1281 = vpop.f32.mrb[0].mxu0
        %v1282 = vadd.f32 %v1092, %v1281
        %v1283 = vpop.f32.mrb[0].mxu0
        %v1284 = vpop.f32.mrb[0].mxu0
        %v1285 = vadd.f32 %v1092, %v1284
        %v1286 = vpop.f32.mrb[0].mxu0
        %1287 = vmatprep.mubr.bf16.mxu0 0
        %1288 = vmatmul.mubr.bf16.gmra.mrb[0].mxu0 %v1153
        %v1289 = vpop.f32.mrb[0].mxu0
        %v1290 = vadd.f32 %v1092, %v1289
        %v1291 = vpop.f32.mrb[0].mxu0
        %v1292 = vpop.f32.mrb[0].mxu0
        %v1293 = vadd.f32 %v1092, %v1292
        %v1294 = vpop.f32.mrb[0].mxu0
        %1295 = vmatprep.mubr.bf16.mxu0 0
        %1296 = vmatmul.mubr.bf16.gmra.mrb[0].mxu0 %v1156
        %v1297 = vpop.f32.mrb[0].mxu0
        %v1298 = vadd.f32 %v1092, %v1297
        %v1299 = vpop.f32.mrb[0].mxu0
        %v1300 = vpop.f32.mrb[0].mxu0
        %v1301 = vadd.f32 %v1092, %v1300
        %v1302 = vpop.f32.mrb[0].mxu0
        %1303 = vmatprep.mubr.bf16.mxu0 0
        %1304 = vmatmul.mubr.bf16.gmra.mrb[0].mxu0 %v1159
        %v1305 = vpop.f32.mrb[0].mxu0
        %v1306 = vadd.f32 %v1092, %v1305
        %v1307 = vpop.f32.mrb[0].mxu0
        %v1308 = vpop.f32.mrb[0].mxu0
        %v1309 = vadd.f32 %v1092, %v1308
        %v1310 = vpop.f32.mrb[0].mxu0
        %1311 = vmatprep.mubr.bf16.mxu0 0
        %1312 = vmatmul.mubr.bf16.gmra.mrb[0].mxu0 %v1162
        %v1313 = vpop.f32.mrb[0].mxu0
        %v1314 = vadd.f32 %v1092, %v1313
        %v1315 = vpop.f32.mrb[0].mxu0
        %v1316 = vpop.f32.mrb[0].mxu0
        %v1317 = vadd.f32 %v1092, %v1316
        %v1318 = vpop.f32.mrb[0].mxu0
        %1319 = vmatprep.mubr.bf16.mxu0 0
        %1320 = vmatmul.mubr.bf16.gmra.mrb[0].mxu0 %v1165
        %v1321 = vpop.f32.mrb[0].mxu0
        %v1322 = vadd.f32 %v1092, %v1321
        %v1323 = vpop.f32.mrb[0].mxu0
        %v1324 = vpop.f32.mrb[0].mxu0
        %v1325 = vadd.f32 %v1092, %v1324
        %v1326 = vpop.f32.mrb[0].mxu0
        %1327 = vdwg.mxu0
        %v1328 = vmax.f32 %v1202, 0.0
        %v1329 = vmax.f32 %v1205, 0.0
        %v1330 = vmax.f32 %v1210, 0.0
        %v1331 = vmax.f32 %v1213, 0.0
        %v1332 = vmax.f32 %v1218, 0.0
        %v1333 = vmax.f32 %v1221, 0.0
        %v1334 = vmax.f32 %v1226, 0.0
        %v1335 = vmax.f32 %v1229, 0.0
        %v1336 = vmax.f32 %v1234, 0.0
        %v1337 = vmax.f32 %v1237, 0.0
        %v1338 = vmax.f32 %v1242, 0.0
        %v1339 = vmax.f32 %v1245, 0.0
        %v1340 = vmax.f32 %v1250, 0.0
        %v1341 = vmax.f32 %v1253, 0.0
        %v1342 = vmax.f32 %v1258, 0.0
        %v1343 = vmax.f32 %v1261, 0.0
        %v1344 = vmax.f32 %v1266, 0.0
        %v1345 = vmax.f32 %v1269, 0.0
        %v1346 = vmax.f32 %v1274, 0.0
        %v1347 = vmax.f32 %v1277, 0.0
        %v1348 = vmax.f32 %v1282, 0.0
        %v1349 = vmax.f32 %v1285, 0.0
        %v1350 = vmax.f32 %v1290, 0.0
        %v1351 = vmax.f32 %v1293, 0.0
        %v1352 = vmax.f32 %v1298, 0.0
        %v1353 = vmax.f32 %v1301, 0.0
        %v1354 = vmax.f32 %v1306, 0.0
        %v1355 = vmax.f32 %v1309, 0.0
        %v1356 = vmax.f32 %v1314, 0.0
        %v1357 = vmax.f32 %v1317, 0.0
        %v1358 = vmax.f32 %v1322, 0.0
        %v1359 = vmax.f32 %v1325, 0.0
        %v1360 = vpack.c.bf16 %v1329, %v1328
        %v1361 = vpack.c.bf16 %v1331, %v1330
        %v1362 = vpack.c.bf16 %v1333, %v1332
        %v1363 = vpack.c.bf16 %v1335, %v1334
        %v1364 = vpack.c.bf16 %v1337, %v1336
        %v1365 = vpack.c.bf16 %v1339, %v1338
        %v1366 = vpack.c.bf16 %v1341, %v1340
        %v1367 = vpack.c.bf16 %v1343, %v1342
        %v1368 = vpack.c.bf16 %v1345, %v1344
        %v1369 = vpack.c.bf16 %v1347, %v1346
        %v1370 = vpack.c.bf16 %v1349, %v1348
        %v1371 = vpack.c.bf16 %v1351, %v1350
        %v1372 = vpack.c.bf16 %v1353, %v1352
        %v1373 = vpack.c.bf16 %v1355, %v1354
        %v1374 = vpack.c.bf16 %v1357, %v1356
        %v1375 = vpack.c.bf16 %v1359, %v1358
        %v1376 = vld [vmem:[%s5] sm:$0xff]
        %v1377 = vld [vmem:[%s5 + $0x8] sm:$0xff]
        %v1378 = vld [vmem:[%s5 + $0x10] sm:$0xff]
        %v1379 = vld [vmem:[%s5 + $0x18] sm:$0xff]
        %v1380 = vld [vmem:[%s5 + $0x20] sm:$0xff]
        %v1381 = vld [vmem:[%s5 + $0x28] sm:$0xff]
        %v1382 = vld [vmem:[%s5 + $0x30] sm:$0xff]
        %v1383 = vld [vmem:[%s5 + $0x38] sm:$0xff]
        %v1384 = vld [vmem:[%s5 + $0x40] sm:$0xff]
        %v1385 = vld [vmem:[%s5 + $0x48] sm:$0xff]
        %v1386 = vld [vmem:[%s5 + $0x50] sm:$0xff]
        %v1387 = vld [vmem:[%s5 + $0x58] sm:$0xff]
        %v1388 = vld [vmem:[%s5 + $0x60] sm:$0xff]
        %v1389 = vld [vmem:[%s5 + $0x68] sm:$0xff]
        %v1390 = vld [vmem:[%s5 + $0x70] sm:$0xff]
        %v1391 = vld [vmem:[%s5 + $0x78] sm:$0xff]
        %v1392 = vld [vmem:[%s6] sm:$0x3]
        %v1394 = vlaneseq
        %v1395 = vshrl.u32 %v1394, 7
        %v1396 = vsub.s32 0, %v1395
        %v1397 = vrot.slane %v1392, %v1396
        %v1398 = vlaneseq
        %v1399 = vshrl.u32 %v1398, 7
        %v1400 = vsub.s32 1, %v1399
        %v1401 = vrot.slane %v1392, %v1400
        %v1420 = vunpack.c.l.b16 %v1376
        %v1421 = vunpack.c.h.b16 %v1376
        %v1422 = vunpack.c.l.b16 %v1377
        %v1423 = vunpack.c.h.b16 %v1377
        %v1424 = vunpack.c.l.b16 %v1378
        %v1425 = vunpack.c.h.b16 %v1378
        %v1426 = vunpack.c.l.b16 %v1379
        %v1427 = vunpack.c.h.b16 %v1379
        %v1428 = vunpack.c.l.b16 %v1380
        %v1429 = vunpack.c.h.b16 %v1380
        %v1430 = vunpack.c.l.b16 %v1381
        %v1431 = vunpack.c.h.b16 %v1381
        %v1432 = vunpack.c.l.b16 %v1382
        %v1433 = vunpack.c.h.b16 %v1382
        %v1434 = vunpack.c.l.b16 %v1383
        %v1435 = vunpack.c.h.b16 %v1383
        %v1436 = vunpack.c.l.b16 %v1384
        %v1437 = vunpack.c.h.b16 %v1384
        %v1438 = vunpack.c.l.b16 %v1385
        %v1439 = vunpack.c.h.b16 %v1385
        %v1440 = vunpack.c.l.b16 %v1386
        %v1441 = vunpack.c.h.b16 %v1386
        %v1442 = vunpack.c.l.b16 %v1387
        %v1443 = vunpack.c.h.b16 %v1387
        %v1444 = vunpack.c.l.b16 %v1388
        %v1445 = vunpack.c.h.b16 %v1388
        %v1446 = vunpack.c.l.b16 %v1389
        %v1447 = vunpack.c.h.b16 %v1389
        %v1448 = vunpack.c.l.b16 %v1390
        %v1449 = vunpack.c.h.b16 %v1390
        %v1450 = vunpack.c.l.b16 %v1391
        %v1451 = vunpack.c.h.b16 %v1391
        %v1452 = vpack.c.b16 %v1422, %v1420
        %v1453 = vpack.c.b16 %v1423, %v1421
        %v1454 = vpack.c.b16 %v1426, %v1424
        %v1455 = vpack.c.b16 %v1427, %v1425
        %v1456 = vpack.c.b16 %v1430, %v1428
        %v1457 = vpack.c.b16 %v1431, %v1429
        %v1458 = vpack.c.b16 %v1434, %v1432
        %v1459 = vpack.c.b16 %v1435, %v1433
        %v1460 = vpack.c.b16 %v1438, %v1436
        %v1461 = vpack.c.b16 %v1439, %v1437
        %v1462 = vpack.c.b16 %v1442, %v1440
        %v1463 = vpack.c.b16 %v1443, %v1441
        %v1464 = vpack.c.b16 %v1446, %v1444
        %v1465 = vpack.c.b16 %v1447, %v1445
        %v1466 = vpack.c.b16 %v1450, %v1448
        %v1467 = vpack.c.b16 %v1451, %v1449
        %1484 = vmatprep.subr.bf16.mxu0 %v1453
        %1485 = vmatpush1.bf16.msra.mxu0 %v1452
        %1486 = vmatprep.subr.bf16.mxu0 %v1455
        %1487 = vmatpush1.bf16.msra.mxu0 %v1454
        %1488 = vmatprep.subr.bf16.mxu0 %v1457
        %1489 = vmatpush1.bf16.msra.mxu0 %v1456
        %1490 = vmatprep.subr.bf16.mxu0 %v1459
        %1491 = vmatpush1.bf16.msra.mxu0 %v1458
        %1492 = vmatprep.subr.bf16.mxu0 %v1461
        %1493 = vmatpush1.bf16.msra.mxu0 %v1460
        %1494 = vmatprep.subr.bf16.mxu0 %v1463
        %1495 = vmatpush1.bf16.msra.mxu0 %v1462
        %1496 = vmatprep.subr.bf16.mxu0 %v1465
        %1497 = vmatpush1.bf16.msra.mxu0 %v1464
        %1498 = vmatprep.subr.bf16.mxu0 %v1467
        %1499 = vmatpush1.bf16.msra.mxu0 %v1466
        %1500 = vmatprep.subr.bf16.mxu0 0
        %1501 = vmatpush1.bf16.msra.mxu0 0
        %1502 = vmatprep.subr.bf16.mxu0 0
        %1503 = vmatpush1.bf16.msra.mxu0 0
        %1504 = vmatprep.subr.bf16.mxu0 0
        %1505 = vmatpush1.bf16.msra.mxu0 0
        %1506 = vmatprep.subr.bf16.mxu0 0
        %1507 = vmatpush1.bf16.msra.mxu0 0
        %1508 = vmatprep.subr.bf16.mxu0 0
        %1509 = vmatpush1.bf16.msra.mxu0 0
        %1510 = vmatprep.subr.bf16.mxu0 0
        %1511 = vmatpush1.bf16.msra.mxu0 0
        %1512 = vmatprep.subr.bf16.mxu0 0
        %1513 = vmatpush1.bf16.msra.mxu0 0
        %1514 = vmatprep.subr.bf16.mxu0 0
        %1515 = vmatpush1.bf16.msra.mxu0 0
        %1516 = vmatprep.mubr.bf16.mxu0 0
        %1517 = vmatmul.mubr.bf16.gmra.mrb[0].mxu0 %v1360
        %v1518 = vpop.f32.mrb[0].mxu0
        %v1519 = vadd.f32 %v1397, %v1518
        %v1520 = vpop.f32.mrb[0].mxu0
        %v1521 = vadd.f32 %v1401, %v1520
        %v1522 = vpop.f32.mrb[0].mxu0
        %v1523 = vadd.f32 %v1397, %v1522
        %v1524 = vpop.f32.mrb[0].mxu0
        %v1525 = vadd.f32 %v1401, %v1524
        %1526 = vmatprep.mubr.bf16.mxu0 0
        %1527 = vmatmul.mubr.bf16.gmra.mrb[0].mxu0 %v1361
        %v1528 = vpop.f32.mrb[0].mxu0
        %v1529 = vadd.f32 %v1397, %v1528
        %v1530 = vpop.f32.mrb[0].mxu0
        %v1531 = vadd.f32 %v1401, %v1530
        %v1532 = vpop.f32.mrb[0].mxu0
        %v1533 = vadd.f32 %v1397, %v1532
        %v1534 = vpop.f32.mrb[0].mxu0
        %v1535 = vadd.f32 %v1401, %v1534
        %1536 = vmatprep.mubr.bf16.mxu0 0
        %1537 = vmatmul.mubr.bf16.gmra.mrb[0].mxu0 %v1362
        %v1538 = vpop.f32.mrb[0].mxu0
        %v1539 = vadd.f32 %v1397, %v1538
        %v1540 = vpop.f32.mrb[0].mxu0
        %v1541 = vadd.f32 %v1401, %v1540
        %v1542 = vpop.f32.mrb[0].mxu0
        %v1543 = vadd.f32 %v1397, %v1542
        %v1544 = vpop.f32.mrb[0].mxu0
        %v1545 = vadd.f32 %v1401, %v1544
        %1546 = vmatprep.mubr.bf16.mxu0 0
        %1547 = vmatmul.mubr.bf16.gmra.mrb[0].mxu0 %v1363
        %v1548 = vpop.f32.mrb[0].mxu0
        %v1549 = vadd.f32 %v1397, %v1548
        %v1550 = vpop.f32.mrb[0].mxu0
        %v1551 = vadd.f32 %v1401, %v1550
        %v1552 = vpop.f32.mrb[0].mxu0
        %v1553 = vadd.f32 %v1397, %v1552
        %v1554 = vpop.f32.mrb[0].mxu0
        %v1555 = vadd.f32 %v1401, %v1554
        %1556 = vmatprep.mubr.bf16.mxu0 0
        %1557 = vmatmul.mubr.bf16.gmra.mrb[0].mxu0 %v1364
        %v1558 = vpop.f32.mrb[0].mxu0
        %v1559 = vadd.f32 %v1397, %v1558
        %v1560 = vpop.f32.mrb[0].mxu0
        %v1561 = vadd.f32 %v1401, %v1560
        %v1562 = vpop.f32.mrb[0].mxu0
        %v1563 = vadd.f32 %v1397, %v1562
        %v1564 = vpop.f32.mrb[0].mxu0
        %v1565 = vadd.f32 %v1401, %v1564
        %1566 = vmatprep.mubr.bf16.mxu0 0
        %1567 = vmatmul.mubr.bf16.gmra.mrb[0].mxu0 %v1365
        %v1568 = vpop.f32.mrb[0].mxu0
        %v1569 = vadd.f32 %v1397, %v1568
        %v1570 = vpop.f32.mrb[0].mxu0
        %v1571 = vadd.f32 %v1401, %v1570
        %v1572 = vpop.f32.mrb[0].mxu0
        %v1573 = vadd.f32 %v1397, %v1572
        %v1574 = vpop.f32.mrb[0].mxu0
        %v1575 = vadd.f32 %v1401, %v1574
        %1576 = vmatprep.mubr.bf16.mxu0 0
        %1577 = vmatmul.mubr.bf16.gmra.mrb[0].mxu0 %v1366
        %v1578 = vpop.f32.mrb[0].mxu0
        %v1579 = vadd.f32 %v1397, %v1578
        %v1580 = vpop.f32.mrb[0].mxu0
        %v1581 = vadd.f32 %v1401, %v1580
        %v1582 = vpop.f32.mrb[0].mxu0
        %v1583 = vadd.f32 %v1397, %v1582
        %v1584 = vpop.f32.mrb[0].mxu0
        %v1585 = vadd.f32 %v1401, %v1584
        %1586 = vmatprep.mubr.bf16.mxu0 0
        %1587 = vmatmul.mubr.bf16.gmra.mrb[0].mxu0 %v1367
        %v1588 = vpop.f32.mrb[0].mxu0
        %v1589 = vadd.f32 %v1397, %v1588
        %v1590 = vpop.f32.mrb[0].mxu0
        %v1591 = vadd.f32 %v1401, %v1590
        %v1592 = vpop.f32.mrb[0].mxu0
        %v1593 = vadd.f32 %v1397, %v1592
        %v1594 = vpop.f32.mrb[0].mxu0
        %v1595 = vadd.f32 %v1401, %v1594
        %1596 = vmatprep.mubr.bf16.mxu0 0
        %1597 = vmatmul.mubr.bf16.gmra.mrb[0].mxu0 %v1368
        %v1598 = vpop.f32.mrb[0].mxu0
        %v1599 = vadd.f32 %v1397, %v1598
        %v1600 = vpop.f32.mrb[0].mxu0
        %v1601 = vadd.f32 %v1401, %v1600
        %v1602 = vpop.f32.mrb[0].mxu0
        %v1603 = vadd.f32 %v1397, %v1602
        %v1604 = vpop.f32.mrb[0].mxu0
        %v1605 = vadd.f32 %v1401, %v1604
        %1606 = vmatprep.mubr.bf16.mxu0 0
        %1607 = vmatmul.mubr.bf16.gmra.mrb[0].mxu0 %v1369
        %v1608 = vpop.f32.mrb[0].mxu0
        %v1609 = vadd.f32 %v1397, %v1608
        %v1610 = vpop.f32.mrb[0].mxu0
        %v1611 = vadd.f32 %v1401, %v1610
        %v1612 = vpop.f32.mrb[0].mxu0
        %v1613 = vadd.f32 %v1397, %v1612
        %v1614 = vpop.f32.mrb[0].mxu0
        %v1615 = vadd.f32 %v1401, %v1614
        %1616 = vmatprep.mubr.bf16.mxu0 0
        %1617 = vmatmul.mubr.bf16.gmra.mrb[0].mxu0 %v1370
        %v1618 = vpop.f32.mrb[0].mxu0
        %v1619 = vadd.f32 %v1397, %v1618
        %v1620 = vpop.f32.mrb[0].mxu0
        %v1621 = vadd.f32 %v1401, %v1620
        %v1622 = vpop.f32.mrb[0].mxu0
        %v1623 = vadd.f32 %v1397, %v1622
        %v1624 = vpop.f32.mrb[0].mxu0
        %v1625 = vadd.f32 %v1401, %v1624
        %1626 = vmatprep.mubr.bf16.mxu0 0
        %1627 = vmatmul.mubr.bf16.gmra.mrb[0].mxu0 %v1371
        %v1628 = vpop.f32.mrb[0].mxu0
        %v1629 = vadd.f32 %v1397, %v1628
        %v1630 = vpop.f32.mrb[0].mxu0
        %v1631 = vadd.f32 %v1401, %v1630
        %v1632 = vpop.f32.mrb[0].mxu0
        %v1633 = vadd.f32 %v1397, %v1632
        %v1634 = vpop.f32.mrb[0].mxu0
        %v1635 = vadd.f32 %v1401, %v1634
        %1636 = vmatprep.mubr.bf16.mxu0 0
        %1637 = vmatmul.mubr.bf16.gmra.mrb[0].mxu0 %v1372
        %v1638 = vpop.f32.mrb[0].mxu0
        %v1639 = vadd.f32 %v1397, %v1638
        %v1640 = vpop.f32.mrb[0].mxu0
        %v1641 = vadd.f32 %v1401, %v1640
        %v1642 = vpop.f32.mrb[0].mxu0
        %v1643 = vadd.f32 %v1397, %v1642
        %v1644 = vpop.f32.mrb[0].mxu0
        %v1645 = vadd.f32 %v1401, %v1644
        %1646 = vmatprep.mubr.bf16.mxu0 0
        %1647 = vmatmul.mubr.bf16.gmra.mrb[0].mxu0 %v1373
        %v1648 = vpop.f32.mrb[0].mxu0
        %v1649 = vadd.f32 %v1397, %v1648
        %v1650 = vpop.f32.mrb[0].mxu0
        %v1651 = vadd.f32 %v1401, %v1650
        %v1652 = vpop.f32.mrb[0].mxu0
        %v1653 = vadd.f32 %v1397, %v1652
        %v1654 = vpop.f32.mrb[0].mxu0
        %v1655 = vadd.f32 %v1401, %v1654
        %1656 = vmatprep.mubr.bf16.mxu0 0
        %1657 = vmatmul.mubr.bf16.gmra.mrb[0].mxu0 %v1374
        %v1658 = vpop.f32.mrb[0].mxu0
        %v1659 = vadd.f32 %v1397, %v1658
        %v1660 = vpop.f32.mrb[0].mxu0
        %v1661 = vadd.f32 %v1401, %v1660
        %v1662 = vpop.f32.mrb[0].mxu0
        %v1663 = vadd.f32 %v1397, %v1662
        %v1664 = vpop.f32.mrb[0].mxu0
        %v1665 = vadd.f32 %v1401, %v1664
        %1666 = vmatprep.mubr.bf16.mxu0 0
        %1667 = vmatmul.mubr.bf16.gmra.mrb[0].mxu0 %v1375
        %v1668 = vpop.f32.mrb[0].mxu0
        %v1669 = vadd.f32 %v1397, %v1668
        %v1670 = vpop.f32.mrb[0].mxu0
        %v1671 = vadd.f32 %v1401, %v1670
        %v1672 = vpop.f32.mrb[0].mxu0
        %v1673 = vadd.f32 %v1397, %v1672
        %v1674 = vpop.f32.mrb[0].mxu0
        %v1675 = vadd.f32 %v1401, %v1674
        %1676 = vdwg.mxu0
        %v1677 = vmax.f32 %v1519, 0.0
        %v1678 = vmax.f32 %v1521, 0.0
        %v1679 = vmax.f32 %v1523, 0.0
        %v1680 = vmax.f32 %v1525, 0.0
        %v1681 = vmax.f32 %v1529, 0.0
        %v1682 = vmax.f32 %v1531, 0.0
        %v1683 = vmax.f32 %v1533, 0.0
        %v1684 = vmax.f32 %v1535, 0.0
        %v1685 = vmax.f32 %v1539, 0.0
        %v1686 = vmax.f32 %v1541, 0.0
        %v1687 = vmax.f32 %v1543, 0.0
        %v1688 = vmax.f32 %v1545, 0.0
        %v1689 = vmax.f32 %v1549, 0.0
        %v1690 = vmax.f32 %v1551, 0.0
        %v1691 = vmax.f32 %v1553, 0.0
        %v1692 = vmax.f32 %v1555, 0.0
        %v1693 = vmax.f32 %v1559, 0.0
        %v1694 = vmax.f32 %v1561, 0.0
        %v1695 = vmax.f32 %v1563, 0.0
        %v1696 = vmax.f32 %v1565, 0.0
        %v1697 = vmax.f32 %v1569, 0.0
        %v1698 = vmax.f32 %v1571, 0.0
        %v1699 = vmax.f32 %v1573, 0.0
        %v1700 = vmax.f32 %v1575, 0.0
        %v1701 = vmax.f32 %v1579, 0.0
        %v1702 = vmax.f32 %v1581, 0.0
        %v1703 = vmax.f32 %v1583, 0.0
        %v1704 = vmax.f32 %v1585, 0.0
        %v1705 = vmax.f32 %v1589, 0.0
        %v1706 = vmax.f32 %v1591, 0.0
        %v1707 = vmax.f32 %v1593, 0.0
        %v1708 = vmax.f32 %v1595, 0.0
        %v1709 = vmax.f32 %v1599, 0.0
        %v1710 = vmax.f32 %v1601, 0.0
        %v1711 = vmax.f32 %v1603, 0.0
        %v1712 = vmax.f32 %v1605, 0.0
        %v1713 = vmax.f32 %v1609, 0.0
        %v1714 = vmax.f32 %v1611, 0.0
        %v1715 = vmax.f32 %v1613, 0.0
        %v1716 = vmax.f32 %v1615, 0.0
        %v1717 = vmax.f32 %v1619, 0.0
        %v1718 = vmax.f32 %v1621, 0.0
        %v1719 = vmax.f32 %v1623, 0.0
        %v1720 = vmax.f32 %v1625, 0.0
        %v1721 = vmax.f32 %v1629, 0.0
        %v1722 = vmax.f32 %v1631, 0.0
        %v1723 = vmax.f32 %v1633, 0.0
        %v1724 = vmax.f32 %v1635, 0.0
        %v1725 = vmax.f32 %v1639, 0.0
        %v1726 = vmax.f32 %v1641, 0.0
        %v1727 = vmax.f32 %v1643, 0.0
        %v1728 = vmax.f32 %v1645, 0.0
        %v1729 = vmax.f32 %v1649, 0.0
        %v1730 = vmax.f32 %v1651, 0.0
        %v1731 = vmax.f32 %v1653, 0.0
        %v1732 = vmax.f32 %v1655, 0.0
        %v1733 = vmax.f32 %v1659, 0.0
        %v1734 = vmax.f32 %v1661, 0.0
        %v1735 = vmax.f32 %v1663, 0.0
        %v1736 = vmax.f32 %v1665, 0.0
        %v1737 = vmax.f32 %v1669, 0.0
        %v1738 = vmax.f32 %v1671, 0.0
        %v1739 = vmax.f32 %v1673, 0.0
        %v1740 = vmax.f32 %v1675, 0.0
        %v1741 = vpack.c.bf16 %v1679, %v1677
        %v1742 = vpack.c.bf16 %v1680, %v1678
        %v1743 = vpack.c.bf16 %v1683, %v1681
        %v1744 = vpack.c.bf16 %v1684, %v1682
        %v1745 = vpack.c.bf16 %v1687, %v1685
        %v1746 = vpack.c.bf16 %v1688, %v1686
        %v1747 = vpack.c.bf16 %v1691, %v1689
        %v1748 = vpack.c.bf16 %v1692, %v1690
        %v1749 = vpack.c.bf16 %v1695, %v1693
        %v1750 = vpack.c.bf16 %v1696, %v1694
        %v1751 = vpack.c.bf16 %v1699, %v1697
        %v1752 = vpack.c.bf16 %v1700, %v1698
        %v1753 = vpack.c.bf16 %v1703, %v1701
        %v1754 = vpack.c.bf16 %v1704, %v1702
        %v1755 = vpack.c.bf16 %v1707, %v1705
        %v1756 = vpack.c.bf16 %v1708, %v1706
        %v1757 = vpack.c.bf16 %v1711, %v1709
        %v1758 = vpack.c.bf16 %v1712, %v1710
        %v1759 = vpack.c.bf16 %v1715, %v1713
        %v1760 = vpack.c.bf16 %v1716, %v1714
        %v1761 = vpack.c.bf16 %v1719, %v1717
        %v1762 = vpack.c.bf16 %v1720, %v1718
        %v1763 = vpack.c.bf16 %v1723, %v1721
        %v1764 = vpack.c.bf16 %v1724, %v1722
        %v1765 = vpack.c.bf16 %v1727, %v1725
        %v1766 = vpack.c.bf16 %v1728, %v1726
        %v1767 = vpack.c.bf16 %v1731, %v1729
        %v1768 = vpack.c.bf16 %v1732, %v1730
        %v1769 = vpack.c.bf16 %v1735, %v1733
        %v1770 = vpack.c.bf16 %v1736, %v1734
        %v1771 = vpack.c.bf16 %v1739, %v1737
        %v1772 = vpack.c.bf16 %v1740, %v1738
        %v1805 = vunpack.c.l.b16 %v1741
        %v1806 = vunpack.c.l.b16 %v1742
        %v1807 = vunpack.c.h.b16 %v1741
        %v1808 = vunpack.c.h.b16 %v1742
        %v1809 = vunpack.c.l.b16 %v1743
        %v1810 = vunpack.c.l.b16 %v1744
        %v1811 = vunpack.c.h.b16 %v1743
        %v1812 = vunpack.c.h.b16 %v1744
        %v1813 = vunpack.c.l.b16 %v1745
        %v1814 = vunpack.c.l.b16 %v1746
        %v1815 = vunpack.c.h.b16 %v1745
        %v1816 = vunpack.c.h.b16 %v1746
        %v1817 = vunpack.c.l.b16 %v1747
        %v1818 = vunpack.c.l.b16 %v1748
        %v1819 = vunpack.c.h.b16 %v1747
        %v1820 = vunpack.c.h.b16 %v1748
        %v1821 = vunpack.c.l.b16 %v1749
        %v1822 = vunpack.c.l.b16 %v1750
        %v1823 = vunpack.c.h.b16 %v1749
        %v1824 = vunpack.c.h.b16 %v1750
        %v1825 = vunpack.c.l.b16 %v1751
        %v1826 = vunpack.c.l.b16 %v1752
        %v1827 = vunpack.c.h.b16 %v1751
        %v1828 = vunpack.c.h.b16 %v1752
        %v1829 = vunpack.c.l.b16 %v1753
        %v1830 = vunpack.c.l.b16 %v1754
        %v1831 = vunpack.c.h.b16 %v1753
        %v1832 = vunpack.c.h.b16 %v1754
        %v1833 = vunpack.c.l.b16 %v1755
        %v1834 = vunpack.c.l.b16 %v1756
        %v1835 = vunpack.c.h.b16 %v1755
        %v1836 = vunpack.c.h.b16 %v1756
        %v1837 = vunpack.c.l.b16 %v1757
        %v1838 = vunpack.c.l.b16 %v1758
        %v1839 = vunpack.c.h.b16 %v1757
        %v1840 = vunpack.c.h.b16 %v1758
        %v1841 = vunpack.c.l.b16 %v1759
        %v1842 = vunpack.c.l.b16 %v1760
        %v1843 = vunpack.c.h.b16 %v1759
        %v1844 = vunpack.c.h.b16 %v1760
        %v1845 = vunpack.c.l.b16 %v1761
        %v1846 = vunpack.c.l.b16 %v1762
        %v1847 = vunpack.c.h.b16 %v1761
        %v1848 = vunpack.c.h.b16 %v1762
        %v1849 = vunpack.c.l.b16 %v1763
        %v1850 = vunpack.c.l.b16 %v1764
        %v1851 = vunpack.c.h.b16 %v1763
        %v1852 = vunpack.c.h.b16 %v1764
        %v1853 = vunpack.c.l.b16 %v1765
        %v1854 = vunpack.c.l.b16 %v1766
        %v1855 = vunpack.c.h.b16 %v1765
        %v1856 = vunpack.c.h.b16 %v1766
        %v1857 = vunpack.c.l.b16 %v1767
        %v1858 = vunpack.c.l.b16 %v1768
        %v1859 = vunpack.c.h.b16 %v1767
        %v1860 = vunpack.c.h.b16 %v1768
        %v1861 = vunpack.c.l.b16 %v1769
        %v1862 = vunpack.c.l.b16 %v1770
        %v1863 = vunpack.c.h.b16 %v1769
        %v1864 = vunpack.c.h.b16 %v1770
        %v1865 = vunpack.c.l.b16 %v1771
        %v1866 = vunpack.c.l.b16 %v1772
        %v1867 = vunpack.c.h.b16 %v1771
        %v1868 = vunpack.c.h.b16 %v1772
        %v1869 = vpack.c.b16 %v1806, %v1805
        %v1870 = vpack.c.b16 %v1808, %v1807
        %v1871 = vpack.c.b16 %v1810, %v1809
        %v1872 = vpack.c.b16 %v1812, %v1811
        %v1873 = vpack.c.b16 %v1814, %v1813
        %v1874 = vpack.c.b16 %v1816, %v1815
        %v1875 = vpack.c.b16 %v1818, %v1817
        %v1876 = vpack.c.b16 %v1820, %v1819
        %v1877 = vpack.c.b16 %v1822, %v1821
        %v1878 = vpack.c.b16 %v1824, %v1823
        %v1879 = vpack.c.b16 %v1826, %v1825
        %v1880 = vpack.c.b16 %v1828, %v1827
        %v1881 = vpack.c.b16 %v1830, %v1829
        %v1882 = vpack.c.b16 %v1832, %v1831
        %v1883 = vpack.c.b16 %v1834, %v1833
        %v1884 = vpack.c.b16 %v1836, %v1835
        %v1885 = vpack.c.b16 %v1838, %v1837
        %v1886 = vpack.c.b16 %v1840, %v1839
        %v1887 = vpack.c.b16 %v1842, %v1841
        %v1888 = vpack.c.b16 %v1844, %v1843
        %v1889 = vpack.c.b16 %v1846, %v1845
        %v1890 = vpack.c.b16 %v1848, %v1847
        %v1891 = vpack.c.b16 %v1850, %v1849
        %v1892 = vpack.c.b16 %v1852, %v1851
        %v1893 = vpack.c.b16 %v1854, %v1853
        %v1894 = vpack.c.b16 %v1856, %v1855
        %v1895 = vpack.c.b16 %v1858, %v1857
        %v1896 = vpack.c.b16 %v1860, %v1859
        %v1897 = vpack.c.b16 %v1862, %v1861
        %v1898 = vpack.c.b16 %v1864, %v1863
        %v1899 = vpack.c.b16 %v1866, %v1865
        %v1900 = vpack.c.b16 %v1868, %v1867
        %1933 = vst [vmem:[%s340] sm:$0xff] %v1869
        %1934 = vst [vmem:[%s340 + $0x8] sm:$0xff] %v1870
        %1935 = vst [vmem:[%s340 + $0x10] sm:$0xff] %v1871
        %1936 = vst [vmem:[%s340 + $0x18] sm:$0xff] %v1872
        %1937 = vst [vmem:[%s340 + $0x20] sm:$0xff] %v1873
        %1938 = vst [vmem:[%s340 + $0x28] sm:$0xff] %v1874
        %1939 = vst [vmem:[%s340 + $0x30] sm:$0xff] %v1875
        %1940 = vst [vmem:[%s340 + $0x38] sm:$0xff] %v1876
        %1941 = vst [vmem:[%s340 + $0x40] sm:$0xff] %v1877
        %1942 = vst [vmem:[%s340 + $0x48] sm:$0xff] %v1878
        %1943 = vst [vmem:[%s340 + $0x50] sm:$0xff] %v1879
        %1944 = vst [vmem:[%s340 + $0x58] sm:$0xff] %v1880
        %1945 = vst [vmem:[%s340 + $0x60] sm:$0xff] %v1881
        %1946 = vst [vmem:[%s340 + $0x68] sm:$0xff] %v1882
        %1947 = vst [vmem:[%s340 + $0x70] sm:$0xff] %v1883
        %1948 = vst [vmem:[%s340 + $0x78] sm:$0xff] %v1884
        %1949 = vst [vmem:[%s340 + $0x80] sm:$0xff] %v1885
        %1950 = vst [vmem:[%s340 + $0x88] sm:$0xff] %v1886
        %1951 = vst [vmem:[%s340 + $0x90] sm:$0xff] %v1887
        %1952 = vst [vmem:[%s340 + $0x98] sm:$0xff] %v1888
        %1953 = vst [vmem:[%s340 + $0xa0] sm:$0xff] %v1889
        %1954 = vst [vmem:[%s340 + $0xa8] sm:$0xff] %v1890
        %1955 = vst [vmem:[%s340 + $0xb0] sm:$0xff] %v1891
        %1956 = vst [vmem:[%s340 + $0xb8] sm:$0xff] %v1892
        %1957 = vst [vmem:[%s340 + $0xc0] sm:$0xff] %v1893
        %1958 = vst [vmem:[%s340 + $0xc8] sm:$0xff] %v1894
        %1959 = vst [vmem:[%s340 + $0xd0] sm:$0xff] %v1895
        %1960 = vst [vmem:[%s340 + $0xd8] sm:$0xff] %v1896
        %1961 = vst [vmem:[%s340 + $0xe0] sm:$0xff] %v1897
        %1962 = vst [vmem:[%s340 + $0xe8] sm:$0xff] %v1898
        %1963 = vst [vmem:[%s340 + $0xf0] sm:$0xff] %v1899
        %1964 = vst [vmem:[%s340 + $0xf8] sm:$0xff] %v1900
        %v1965 = vmax.f32 %v1677, %v1681
        %v1966 = vmax.f32 %v1679, %v1683
        %v1967 = vmax.f32 %v1965, %v1685
        %v1968 = vmax.f32 %v1966, %v1687
        %v1969 = vmax.f32 %v1967, %v1689
        %v1970 = vmax.f32 %v1968, %v1691
        %v1971 = vmax.f32 %v1969, %v1693
        %v1972 = vmax.f32 %v1970, %v1695
        %v1973 = vmax.f32 %v1971, %v1697
        %v1974 = vmax.f32 %v1972, %v1699
        %v1975 = vmax.f32 %v1973, %v1701
        %v1976 = vmax.f32 %v1974, %v1703
        %v1977 = vmax.f32 %v1975, %v1705
        %v1978 = vmax.f32 %v1976, %v1707
        %v1979 = vmax.f32 %v1977, %v1709
        %v1980 = vmax.f32 %v1978, %v1711
        %v1981 = vmax.f32 %v1979, %v1713
        %v1982 = vmax.f32 %v1980, %v1715
        %v1983 = vmax.f32 %v1981, %v1717
        %v1984 = vmax.f32 %v1982, %v1719
        %v1985 = vmax.f32 %v1983, %v1721
        %v1986 = vmax.f32 %v1984, %v1723
        %v1987 = vmax.f32 %v1985, %v1725
        %v1988 = vmax.f32 %v1986, %v1727
        %v1989 = vmax.f32 %v1987, %v1729
        %v1990 = vmax.f32 %v1988, %v1731
        %v1991 = vmax.f32 %v1989, %v1733
        %v1992 = vmax.f32 %v1990, %v1735
        %v1993 = vmax.f32 %v1991, %v1737
        %v1994 = vmax.f32 %v1992, %v1739
        %v1995 = vmax.f32 %v1993, %v1994
        %v1996 = vrot.slane %v1995, 4
        %v1997 = vmax.f32 %v1995, %v1996
        %v1998 = vrot.slane %v1997, 2
        %v1999 = vmax.f32 %v1997, %v1998
        %v2000 = vrot.slane %v1999, 1
        %v2001 = vmax.f32 %v1999, %v2000
        %v2002 = vmax.f32 %v1678, %v1682
        %v2003 = vmax.f32 %v1680, %v1684
        %v2004 = vmax.f32 %v2002, %v1686
        %v2005 = vmax.f32 %v2003, %v1688
        %v2006 = vmax.f32 %v2004, %v1690
        %v2007 = vmax.f32 %v2005, %v1692
        %v2008 = vmax.f32 %v2006, %v1694
        %v2009 = vmax.f32 %v2007, %v1696
        %v2010 = vmax.f32 %v2008, %v1698
        %v2011 = vmax.f32 %v2009, %v1700
        %v2012 = vmax.f32 %v2010, %v1702
        %v2013 = vmax.f32 %v2011, %v1704
        %v2014 = vmax.f32 %v2012, %v1706
        %v2015 = vmax.f32 %v2013, %v1708
        %v2016 = vmax.f32 %v2014, %v1710
        %v2017 = vmax.f32 %v2015, %v1712
        %v2018 = vmax.f32 %v2016, %v1714
        %v2019 = vmax.f32 %v2017, %v1716
        %v2020 = vmax.f32 %v2018, %v1718
        %v2021 = vmax.f32 %v2019, %v1720
        %v2022 = vmax.f32 %v2020, %v1722
        %v2023 = vmax.f32 %v2021, %v1724
        %v2024 = vmax.f32 %v2022, %v1726
        %v2025 = vmax.f32 %v2023, %v1728
        %v2026 = vmax.f32 %v2024, %v1730
        %v2027 = vmax.f32 %v2025, %v1732
        %v2028 = vmax.f32 %v2026, %v1734
        %v2029 = vmax.f32 %v2027, %v1736
        %v2030 = vmax.f32 %v2028, %v1738
        %v2031 = vmax.f32 %v2029, %v1740
        %v2032 = vmax.f32 %v2030, %v2031
        %v2033 = vrot.slane %v2032, 4
        %v2034 = vmax.f32 %v2032, %v2033
        %v2035 = vrot.slane %v2034, 2
        %v2036 = vmax.f32 %v2034, %v2035
        %v2037 = vrot.slane %v2036, 1
        %v2038 = vmax.f32 %v2036, %v2037
        %p2039 = scmp.eq.s32.totalorder %s30, 0
        // Predicated region
        $region49: #{pointcloud_backbone.1} parent=47 // pred_check
          %p2040 = pneg %p2039
        $region50: #{pointcloud_backbone.1} parent=47 // pred_check_branch
          %2042 = sbr.rel (%p2040) target = $region52
        $region51: #{pointcloud_backbone.1} parent=47 // pred_region
          %v2043 = vlaneseq
          %vm2044 = vcmp.ge.s32.totalorder %v2043, 0
          %vm2045 = vcmp.lt.s32.totalorder %v2043, 256
          %vm2046 = vmand %vm2044, %vm2045
          %2047 = vst.msk [vmem:[%s366] sm:$0x3] %vm2046, 0.0
        $region52: #{pointcloud_backbone.1} parent=47 // pred_fallthru
          _
        %v2048 = vld [vmem:[%s366] sm:$0x3]
        %v2051 = vcombine.low %v2001, %v2038
        %v2053 = vunpack.c.l.s4 1966171168
        %v2054 = vunpack.c.0.s8 %v2053
        %v2055 = vlaneseq
        %v2056 = vshrl.u32 %v2055, 7
        %v2057 = vsub.s32 %v2054, %v2056
        %v2058 = vrot.slane %v2051, %v2057
        %v2060 = vunpack.c.l.s4 1966171168
        %v2061 = vunpack.c.0.s8 %v2060
        %v2062 = vlaneseq
        %v2063 = vshrl.u32 %v2062, 7
        %v2064 = vsub.s32 %v2061, %v2063
        %v2065 = vrot.slane %v2058, %v2064
        %v2067 = vmax.f32 %v2048, %v2065
        %v2068 = vlaneseq
        %vm2069 = vcmp.ge.s32.totalorder %v2068, 0
        %vm2070 = vcmp.lt.s32.totalorder %v2068, 256
        %vm2071 = vmand %vm2069, %vm2070
        %2072 = vst.msk [vmem:[%s366] sm:$0x3] %vm2071, %v2067
        %s2073 = sand.u32 %s210, 1
        %s2074 = scalar_lea.sflag [#allocation3], %s2073
        %s2075 = sand.u32 %s210, 1
        %s2076 = smul.addr %s2075, 256
        %s2077 = scalar_lea.vmem [#allocation2], %s2076
        %s2078 = sadd.s32 %s28, %s29
        %p2079 = scmp.lt.s32.totalorder %s2078, 1
        %s2080 = scalar_select %p2079, %s2078, 1
        %s2081 = smul.addr %s2080, 2
        %s2082 = scalar_lea.vmem %s8, %s2081
        // Predicated region
        $region53: #{pointcloud_backbone.1} parent=47 // pred_check
          %p2083 = pneg %p220
        $region54: #{pointcloud_backbone.1} parent=47 // pred_check_branch
          %2085 = sbr.rel (%p2083) target = $region56
        $region55: #{pointcloud_backbone.1} parent=47 // pred_region
          %s2086 = sadd.s32 %s29, %s30
          %s2087 = smul.u32 32, %s2086
          %s2089 = ssub.s32 4096, 4096
          %2090 = vsyncadd %s2074, %s2089
          %s2091 = smul.addr %s2087, 2
          %s2092 = smul.addr %s28, 64
          %s2093 = sadd.s32 %s2091, %s2092
          %s2094 = smul.addr %s2093, 64
          %s2095 = scalar_lea.hbm %s7, %s2094
          %s2096 = sshll.u32 %s2077, 4
          %s2097 = int_to_ptr.vmem [resolvable:$true] %s2096
          %2102 = dma.vmem_to_hbm [thread:$0]  %s2097, 4096, %s2095, %s2074, 128, 128, 8
        $region56: #{pointcloud_backbone.1} parent=47 // pred_fallthru
          _
        // Predicated region
        $region57: #{pointcloud_backbone.1} parent=47 // pred_check
          %p2103 = pneg %p248
        $region58: #{pointcloud_backbone.1} parent=47 // pred_check_branch
          %2105 = sbr.rel (%p2103) target = $region60
        $region59: #{pointcloud_backbone.1} parent=47 // pred_region
          %s2106 = sadd.s32 %s28, %s29
        $region60: #{pointcloud_backbone.1} parent=47 // pred_fallthru
          _
      $region48: #{pointcloud_backbone.1} parent=5 // pred_fallthru
        _
      %p2107 = scmp.le.s32.totalorder 2, %s18
      // Predicated region
      $region61: #{pointcloud_backbone.1} parent=5 // pred_check
        %p2108 = pneg %p2107
      $region62: #{pointcloud_backbone.1} parent=5 // pred_check_branch
        %2110 = sbr.rel (%p2108) target = $region64
      $region63: #{pointcloud_backbone.1} parent=5 // pred_region
        %s2111 = ssub.s32 %s18, 2
        // Predicated region
        $region65: #{pointcloud_backbone.1} parent=63 // pred_check
          %p2112 = pneg %p226
        $region66: #{pointcloud_backbone.1} parent=63 // pred_check_branch
          %2114 = sbr.rel (%p2112) target = $region68
        $region67: #{pointcloud_backbone.1} parent=63 // pred_region
          %s2115 = sand.u32 %s211, 1
          %s2116 = scalar_lea.sflag [#allocation3], %s2115
          %s2117 = sand.u32 %s211, 1
          %s2118 = smul.addr %s2117, 256
          %s2119 = scalar_lea.vmem [#allocation2], %s2118
          %2120 = dma.done %s2116, 4096
        $region68: #{pointcloud_backbone.1} parent=63 // pred_fallthru
          _
        // Predicated region
        $region69: #{pointcloud_backbone.1} parent=63 // pred_check
          %p2121 = pneg %p254
        $region70: #{pointcloud_backbone.1} parent=63 // pred_check_branch
          %2123 = sbr.rel (%p2121) target = $region72
        $region71: #{pointcloud_backbone.1} parent=63 // pred_region
          %s2124 = sadd.s32 %s31, %s32
          %p2125 = scmp.lt.s32.totalorder %s2124, 1
          %s2126 = scalar_select %p2125, %s2124, 1
          %s2127 = smul.addr %s2126, 2
          %s2128 = scalar_lea.vmem %s8, %s2127
        $region72: #{pointcloud_backbone.1} parent=63 // pred_fallthru
          _
      $region64: #{pointcloud_backbone.1} parent=5 // pred_fallthru
        _
    $region6: #{pointcloud_backbone.1} parent=1 // loop_footer
      %s22 = sadd.s32 1, %s18
    $region7: #{pointcloud_backbone.1} parent=1 // loop_footer_branch
      %17 = sbr.rel target = $region3
    $region8: #{pointcloud_backbone.1} parent=1 // loop_exit
      _
    %2129 = vsyncpa [#allocation3], 1
    %s2130 = scalar_lea.sflag [#allocation3], 1
    %2131 = vsyncpa %s2130, 1

</llo_original>
